<compile_context>
chip_gen: v6e
topology: v6e:2x2x1
jax: 0.10.0
libtpu: 0.0.40
codegen_flags: <defaults>
</compile_context>

<pallas_src>
import functools

import jax
import jax.numpy as jnp
from jax import lax
from jax.experimental import pallas as pl
from jax.experimental.pallas import tpu as pltpu


def critic_kernel(x_ref, w1t_ref, b1_ref, wih_ref, whh_ref, bias_ref,
                  w2t_ref, b2_ref, out_ref, *, T, B):
    """
    x_ref    : (T*B, Din)  time-major flattened obs||action (row = t*B + b), f32
    w1t_ref  : (Din, H)    dense1 weight (transposed), bf16
    b1_ref   : (1, H)      f32
    wih_ref  : (H, 4*Hp)   LSTM input weights, gate blocks zero-padded to Hp lanes, bf16
    whh_ref  : (Hp, 4*Hp)  LSTM recurrent weights, rows & gate blocks zero-padded, bf16
    bias_ref : (1, 4*Hp)   b_ih + b_hh, gate blocks zero-padded, f32
    w2t_ref  : (Hp, Op)    dense2 weight (transposed, zero-padded), bf16
    b2_ref   : (1, Op)     f32
    out_ref  : (B, Op)     padded output (real out_dim columns sliced off outside)
    """
    Hp = whh_ref.shape[0]

    # --- dense1 (TimeDistributed Linear) + ReLU: one matmul over all timesteps ---
    w1 = w1t_ref[...].astype(jnp.float32)
    h1 = jnp.maximum(
        jnp.dot(x_ref[...], w1, preferred_element_type=jnp.float32) + b1_ref[...],
        0.0)                                                           # (T*B, H)

    # --- hoisted LSTM input projection: one big matmul, kept register-resident ---
    wih = wih_ref[...].astype(jnp.float32)
    gx = jnp.dot(h1, wih, preferred_element_type=jnp.float32) + bias_ref[...]   # (T*B, 4*Hp)

    # --- LSTM recurrence (num_layers=1, zero initial state), fully unrolled (T static) ---
    # Padded-lane invariant: gate blocks/bias padding is exact zero and h/c start at zero, so
    # the padded hidden lanes stay identically 0 for every step (sigmoid(0)=0.5 gates on c=0,
    # tanh(0)=0).  Keep zero padding and zero initial state in sync if either is ever changed.
    whh = whh_ref[...].astype(jnp.float32)                             # (Hp, 4*Hp)
    h = jnp.zeros((B, Hp), jnp.float32)
    c = jnp.zeros((B, Hp), jnp.float32)
    hs = []
    for t in range(T):  # unrolled; only the h @ whh matmul + gate math is serial
        gates = gx[t * B:(t + 1) * B, :] + jnp.dot(
            h, whh, preferred_element_type=jnp.float32)                # (B, 4*Hp)
        # PyTorch gate ordering: i, f, g, o — each slice is a full 128-lane block
        i_g = jax.nn.sigmoid(gates[:, 0 * Hp:1 * Hp])
        f_g = jax.nn.sigmoid(gates[:, 1 * Hp:2 * Hp])
        g_g = jnp.tanh(gates[:, 2 * Hp:3 * Hp])
        o_g = jax.nn.sigmoid(gates[:, 3 * Hp:4 * Hp])
        c = f_g * c + i_g * g_g
        h = o_g * jnp.tanh(c)
        hs.append(h)

    # --- attention over time against the final hidden state (all 2-D register ops) ---
    scores = [jnp.sum(h_t * h, axis=-1, keepdims=True) for h_t in hs]  # T x (B, 1)
    m = scores[0]
    for s in scores[1:]:
        m = jnp.maximum(m, s)
    exps = [jnp.exp(s - m) for s in scores]
    denom = exps[0]
    for e in exps[1:]:
        denom = denom + e
    inv = pl.reciprocal(denom, approx=False)                           # (B, 1)
    new_hidden = hs[0] * (exps[0] * inv)
    for h_t, e in zip(hs[1:], exps[1:]):
        new_hidden = new_hidden + h_t * (e * inv)
    new_hidden = jnp.maximum(new_hidden, 0.0)                          # ReLU

    # --- dense2 (lane-dense padded output) ---
    w2 = w2t_ref[...].astype(jnp.float32)
    out_ref[...] = jnp.dot(new_hidden, w2, preferred_element_type=jnp.float32) + b2_ref[...]


def prepare_kernel_params(p, *, hidden_pad=128, out_pad=128):
    """Pad / transpose PyTorch-layout params for the kernel.  Call ONCE at init and cache.

    Gate / bias padding is exact zeros so the padded hidden lanes stay identically 0 through the
    recurrence.  Weights are stored bf16 (halves the un-overlapped HBM->VMEM weight DMA); biases
    stay f32 and all in-kernel math is f32.
    """
    H = p["w1"].shape[0]
    out_dim = p["w2"].shape[0]
    Hp, Op = hidden_pad, out_pad

    def pad_gate_cols(w_t):  # (in_dim, 4H) -> (in_dim, 4*Hp), each gate block zero-padded
        in_dim = w_t.shape[0]
        w4 = w_t.reshape(in_dim, 4, H)
        return (jnp.zeros((in_dim, 4, Hp), jnp.float32)
                .at[:, :, :H].set(w4).reshape(in_dim, 4 * Hp))

    wih_t = pad_gate_cols(p["w_ih"].T)                                   # (H, 4*Hp)
    whh_t = pad_gate_cols(p["w_hh"].T)                                   # (H, 4*Hp)
    whh_t = jnp.zeros((Hp, 4 * Hp), jnp.float32).at[:H, :].set(whh_t)    # rows -> (Hp, 4*Hp)

    b4 = (p["b_ih"] + p["b_hh"]).reshape(4, H)
    bias = jnp.zeros((4, Hp), jnp.float32).at[:, :H].set(b4).reshape(1, 4 * Hp)

    w2t = jnp.zeros((Hp, Op), jnp.float32).at[:H, :out_dim].set(p["w2"].T)
    b2 = jnp.zeros((1, Op), jnp.float32).at[0, :out_dim].set(p["b2"])

    bf16 = lambda w: w.astype(jnp.bfloat16)
    # NOTE(v5e): the Hp=128 gate padding quadruples whh bytes but keeps every per-gate slice a
    # full 128-lane block; measure on v5e before reverting (see perf review).
    return {"w1t": bf16(p["w1"].T), "b1": p["b1"][None, :].astype(jnp.float32),
            "wiht": bf16(wih_t), "whht": bf16(whh_t), "bias": bias,
            "w2t": bf16(w2t), "b2": b2}


def critic_forward(obs, action, kp, *, out_dim):
    """Forward pass; wrap in jax.jit so all layout plumbing fuses around the pallas_call."""
    obs_act = jnp.concatenate([obs, action], axis=-1)        # fused by XLA under jit
    B, T, Din = obs_act.shape
    H = kp["b1"].shape[1]
    Hp = kp["whht"].shape[0]
    Op = kp["w2t"].shape[1]

    # Layout plumbing in the wrapper: time-major, flattened (row = t*B + b).
    x_tm = jnp.swapaxes(obs_act, 0, 1).reshape(T * B, Din)

    args = (x_tm, kp["w1t"], kp["b1"], kp["wiht"], kp["whht"],
            kp["bias"], kp["w2t"], kp["b2"])

    flops = (2 * T * B * Din * H               # dense1
             + 2 * T * B * H * 4 * Hp          # hoisted input projection
             + T * 2 * B * Hp * 4 * Hp         # recurrence h @ whh
             + 4 * T * B * Hp                  # attention
             + 2 * B * Hp * Op)                # dense2
    transcendentals = T * B * 5 * Hp + T * B   # gate sigmoids/tanh + softmax exp
    bytes_accessed = sum(a.size * a.dtype.itemsize for a in args) + B * Op * 4

    vmem = pl.BlockSpec(memory_space=pltpu.MemorySpace.VMEM)
    out_padded = pl.pallas_call(
        functools.partial(critic_kernel, T=T, B=B),
        out_shape=jax.ShapeDtypeStruct((B, Op), jnp.float32),
        in_specs=[vmem] * len(args),
        out_specs=vmem,
        cost_estimate=pl.CostEstimate(flops=flops,
                                      transcendentals=transcendentals,
                                      bytes_accessed=bytes_accessed),
    )(*args)

    # TODO(synk): on v7x, shard the batch across the two TensorCores with grid=(B,) +
    # dimension_semantics=("parallel",); skipped here because at B=2 it would serialize (and
    # roughly double) the recurrence on single-TensorCore v5e/v6e.
    # TODO(synk): if the surrounding RL loop evaluates several critic streams/targets, stack
    # them into one call so the matmul M dimension grows toward the MXU height.
    return out_padded[:, :out_dim]


def make_params(key, input_dim, hidden, out_dim):
    ks = jax.random.split(key, 8)
    s = 0.1
    return {
        "w1": s * jax.random.normal(ks[0], (hidden, input_dim), jnp.float32),     # dense1.weight
        "b1": s * jax.random.normal(ks[1], (hidden,), jnp.float32),
        "w_ih": s * jax.random.normal(ks[2], (4 * hidden, hidden), jnp.float32),  # lstm.weight_ih_l0
        "w_hh": s * jax.random.normal(ks[3], (4 * hidden, hidden), jnp.float32),  # lstm.weight_hh_l0
        "b_ih": s * jax.random.normal(ks[4], (4 * hidden,), jnp.float32),
        "b_hh": s * jax.random.normal(ks[5], (4 * hidden,), jnp.float32),
        "w2": s * jax.random.normal(ks[6], (out_dim, hidden), jnp.float32),       # dense2.weight
        "b2": s * jax.random.normal(ks[7], (out_dim,), jnp.float32),
    }


def reference_forward(obs, action, p):
    """Pure-JAX reference replicating the PyTorch forward (unpadded, f32 weights)."""
    obs_act = jnp.concatenate([obs, action], axis=-1)
    B, T, _ = obs_act.shape
    H = p["w1"].shape[0]
    h1 = jax.nn.relu(obs_act @ p["w1"].T + p["b1"])                      # (B,T,H)
    bias = p["b_ih"] + p["b_hh"]
    wih_t, whh_t = p["w_ih"].T, p["w_hh"].T

    def step(carry, x_t):
        h, c = carry
        gates = x_t @ wih_t + h @ whh_t + bias
        i = jax.nn.sigmoid(gates[:, 0:H])
        f = jax.nn.sigmoid(gates[:, H:2 * H])
        g = jnp.tanh(gates[:, 2 * H:3 * H])
        o = jax.nn.sigmoid(gates[:, 3 * H:4 * H])
        c = f * c + i * g
        h = o * jnp.tanh(c)
        return (h, c), h

    (h_fin, _), outs = lax.scan(step, (jnp.zeros((B, H)), jnp.zeros((B, H))),
                                jnp.swapaxes(h1, 0, 1))
    outs = jnp.swapaxes(outs, 0, 1)                                      # (B,T,H)
    attn = jnp.einsum("bth,bh->bt", outs, h_fin)
    soft = jax.nn.softmax(attn, axis=1)
    new_hidden = jax.nn.relu(jnp.einsum("bth,bt->bh", outs, soft))
    return new_hidden @ p["w2"].T + p["b2"]


if __name__ == "__main__":
    key = jax.random.PRNGKey(0)
    B, T = 2, 8
    obs_dim, act_dim = 12, 4
    hidden, out_dim = 64, 5
    input_dim = obs_dim + act_dim

    k_obs, k_act, k_par = jax.random.split(key, 3)
    obs = jax.random.normal(k_obs, (B, T, obs_dim), jnp.float32)
    action = jax.random.normal(k_act, (B, T, act_dim), jnp.float32)
    params = make_params(k_par, input_dim, hidden, out_dim)

    # Parameter padding/transpose hoisted out of the per-call path: done once and cached.
    kp = prepare_kernel_params(params)
    kp = jax.tree_util.tree_map(jax.block_until_ready, kp)

    # One jit around the whole forward so concat/transpose/reshape and the output slice fuse.
    forward = jax.jit(functools.partial(critic_forward, out_dim=out_dim))

    out = forward(obs, action, kp)
    jax.block_until_ready(out)

    ref = reference_forward(obs, action, params)
    assert out.shape == (B, out_dim)
    # Tolerance accounts for bf16 weight storage (all in-kernel math stays f32).
    assert jnp.allclose(out, ref, atol=2e-2, rtol=2e-2), (out, ref)

    print("KERNEL_OK")
</pallas_src>

<mosaic_0001>
module attributes {stable_mosaic.version = 11 : i64} {
  func.func @critic_kernel(%arg0: memref<16x16xf32, #tpu.memory_space<vmem>>, %arg1: memref<16x64xbf16, #tpu.memory_space<vmem>>, %arg2: memref<1x64xf32, #tpu.memory_space<vmem>>, %arg3: memref<64x512xbf16, #tpu.memory_space<vmem>>, %arg4: memref<128x512xbf16, #tpu.memory_space<vmem>>, %arg5: memref<1x512xf32, #tpu.memory_space<vmem>>, %arg6: memref<128x128xbf16, #tpu.memory_space<vmem>>, %arg7: memref<1x128xf32, #tpu.memory_space<vmem>>, %arg8: memref<2x128xf32, #tpu.memory_space<vmem>>) attributes {dimension_semantics = [], scalar_prefetch = 0 : i64, scratch_operands = 0 : i64, tpu.core_type = #tpu.core_type<tc>} {
    %c0 = arith.constant 0 : index
    %c0_0 = arith.constant 0 : index
    %0 = vector.load %arg1[%c0, %c0_0] : memref<16x64xbf16, #tpu.memory_space<vmem>>, vector<16x64xbf16>
    %1 = arith.extf %0 : vector<16x64xbf16> to vector<16x64xf32>
    %c0_1 = arith.constant 0 : index
    %c0_2 = arith.constant 0 : index
    %2 = vector.load %arg0[%c0_1, %c0_2] : memref<16x16xf32, #tpu.memory_space<vmem>>, vector<16x16xf32>
    %cst = arith.constant dense<0.000000e+00> : vector<16x64xf32>
    %3 = tpu.matmul %2, %1, %cst {dimension_numbers = #tpu.dot_dimension_numbers<[1], [0], [0], [1], [0, 0, 1, 1], [], []>} : vector<16x16xf32>, vector<16x64xf32>, vector<16x64xf32> -> vector<16x64xf32>
    %c0_3 = arith.constant 0 : index
    %c0_4 = arith.constant 0 : index
    %4 = vector.load %arg2[%c0_3, %c0_4] : memref<1x64xf32, #tpu.memory_space<vmem>>, vector<1x64xf32>
    %5 = vector.broadcast %4 : vector<1x64xf32> to vector<16x64xf32>
    %6 = arith.addf %3, %5 : vector<16x64xf32>
    %cst_5 = arith.constant 0.000000e+00 : f32
    %7 = vector.broadcast %cst_5 : f32 to vector<16x64xf32>
    %8 = arith.maximumf %6, %7 : vector<16x64xf32>
    %c0_6 = arith.constant 0 : index
    %c0_7 = arith.constant 0 : index
    %9 = vector.load %arg3[%c0_6, %c0_7] : memref<64x512xbf16, #tpu.memory_space<vmem>>, vector<64x512xbf16>
    %10 = arith.extf %9 : vector<64x512xbf16> to vector<64x512xf32>
    %cst_8 = arith.constant dense<0.000000e+00> : vector<16x512xf32>
    %11 = tpu.matmul %8, %10, %cst_8 {dimension_numbers = #tpu.dot_dimension_numbers<[1], [0], [0], [1], [0, 0, 1, 1], [], []>} : vector<16x64xf32>, vector<64x512xf32>, vector<16x512xf32> -> vector<16x512xf32>
    %c0_9 = arith.constant 0 : index
    %c0_10 = arith.constant 0 : index
    %12 = vector.load %arg5[%c0_9, %c0_10] : memref<1x512xf32, #tpu.memory_space<vmem>>, vector<1x512xf32>
    %13 = vector.broadcast %12 : vector<1x512xf32> to vector<16x512xf32>
    %14 = arith.addf %11, %13 : vector<16x512xf32>
    %c0_11 = arith.constant 0 : index
    %c0_12 = arith.constant 0 : index
    %15 = vector.load %arg4[%c0_11, %c0_12] : memref<128x512xbf16, #tpu.memory_space<vmem>>, vector<128x512xbf16>
    %16 = arith.extf %15 : vector<128x512xbf16> to vector<128x512xf32>
    %cst_13 = arith.constant 0.000000e+00 : f32
    %17 = vector.broadcast %cst_13 : f32 to vector<2x128xf32>
    %cst_14 = arith.constant 0.000000e+00 : f32
    %18 = vector.broadcast %cst_14 : f32 to vector<2x128xf32>
    %19 = vector.extract_strided_slice %14 {offsets = [0, 0], sizes = [2, 512], strides = [1, 1]} : vector<16x512xf32> to vector<2x512xf32>
    %cst_15 = arith.constant dense<0.000000e+00> : vector<2x512xf32>
    %20 = tpu.matmul %17, %16, %cst_15 {dimension_numbers = #tpu.dot_dimension_numbers<[1], [0], [0], [1], [0, 0, 1, 1], [], []>} : vector<2x128xf32>, vector<128x512xf32>, vector<2x512xf32> -> vector<2x512xf32>
    %21 = arith.addf %19, %20 : vector<2x512xf32>
    %22 = vector.extract_strided_slice %21 {offsets = [0, 0], sizes = [2, 128], strides = [1, 1]} : vector<2x512xf32> to vector<2x128xf32>
    %23 = arith.negf %22 : vector<2x128xf32>
    %24 = math.exp %23 : vector<2x128xf32>
    %cst_16 = arith.constant 1.000000e+00 : f32
    %25 = vector.broadcast %cst_16 : f32 to vector<2x128xf32>
    %26 = arith.addf %25, %24 : vector<2x128xf32>
    %27 = arith.divf %25, %26 : vector<2x128xf32>
    %28 = vector.extract_strided_slice %21 {offsets = [0, 128], sizes = [2, 128], strides = [1, 1]} : vector<2x512xf32> to vector<2x128xf32>
    %29 = arith.negf %28 : vector<2x128xf32>
    %30 = math.exp %29 : vector<2x128xf32>
    %cst_17 = arith.constant 1.000000e+00 : f32
    %31 = vector.broadcast %cst_17 : f32 to vector<2x128xf32>
    %32 = arith.addf %31, %30 : vector<2x128xf32>
    %33 = arith.divf %31, %32 : vector<2x128xf32>
    %34 = vector.extract_strided_slice %21 {offsets = [0, 256], sizes = [2, 128], strides = [1, 1]} : vector<2x512xf32> to vector<2x128xf32>
    %35 = math.tanh %34 : vector<2x128xf32>
    %36 = vector.extract_strided_slice %21 {offsets = [0, 384], sizes = [2, 128], strides = [1, 1]} : vector<2x512xf32> to vector<2x128xf32>
    %37 = arith.negf %36 : vector<2x128xf32>
    %38 = math.exp %37 : vector<2x128xf32>
    %cst_18 = arith.constant 1.000000e+00 : f32
    %39 = vector.broadcast %cst_18 : f32 to vector<2x128xf32>
    %40 = arith.addf %39, %38 : vector<2x128xf32>
    %41 = arith.divf %39, %40 : vector<2x128xf32>
    %42 = arith.mulf %33, %18 : vector<2x128xf32>
    %43 = arith.mulf %27, %35 : vector<2x128xf32>
    %44 = arith.addf %42, %43 : vector<2x128xf32>
    %45 = math.tanh %44 : vector<2x128xf32>
    %46 = arith.mulf %41, %45 : vector<2x128xf32>
    %47 = vector.extract_strided_slice %14 {offsets = [2, 0], sizes = [2, 512], strides = [1, 1]} : vector<16x512xf32> to vector<2x512xf32>
    %cst_19 = arith.constant dense<0.000000e+00> : vector<2x512xf32>
    %48 = tpu.matmul %46, %16, %cst_19 {dimension_numbers = #tpu.dot_dimension_numbers<[1], [0], [0], [1], [0, 0, 1, 1], [], []>} : vector<2x128xf32>, vector<128x512xf32>, vector<2x512xf32> -> vector<2x512xf32>
    %49 = arith.addf %47, %48 : vector<2x512xf32>
    %50 = vector.extract_strided_slice %49 {offsets = [0, 0], sizes = [2, 128], strides = [1, 1]} : vector<2x512xf32> to vector<2x128xf32>
    %51 = arith.negf %50 : vector<2x128xf32>
    %52 = math.exp %51 : vector<2x128xf32>
    %cst_20 = arith.constant 1.000000e+00 : f32
    %53 = vector.broadcast %cst_20 : f32 to vector<2x128xf32>
    %54 = arith.addf %53, %52 : vector<2x128xf32>
    %55 = arith.divf %53, %54 : vector<2x128xf32>
    %56 = vector.extract_strided_slice %49 {offsets = [0, 128], sizes = [2, 128], strides = [1, 1]} : vector<2x512xf32> to vector<2x128xf32>
    %57 = arith.negf %56 : vector<2x128xf32>
    %58 = math.exp %57 : vector<2x128xf32>
    %cst_21 = arith.constant 1.000000e+00 : f32
    %59 = vector.broadcast %cst_21 : f32 to vector<2x128xf32>
    %60 = arith.addf %59, %58 : vector<2x128xf32>
    %61 = arith.divf %59, %60 : vector<2x128xf32>
    %62 = vector.extract_strided_slice %49 {offsets = [0, 256], sizes = [2, 128], strides = [1, 1]} : vector<2x512xf32> to vector<2x128xf32>
    %63 = math.tanh %62 : vector<2x128xf32>
    %64 = vector.extract_strided_slice %49 {offsets = [0, 384], sizes = [2, 128], strides = [1, 1]} : vector<2x512xf32> to vector<2x128xf32>
    %65 = arith.negf %64 : vector<2x128xf32>
    %66 = math.exp %65 : vector<2x128xf32>
    %cst_22 = arith.constant 1.000000e+00 : f32
    %67 = vector.broadcast %cst_22 : f32 to vector<2x128xf32>
    %68 = arith.addf %67, %66 : vector<2x128xf32>
    %69 = arith.divf %67, %68 : vector<2x128xf32>
    %70 = arith.mulf %61, %44 : vector<2x128xf32>
    %71 = arith.mulf %55, %63 : vector<2x128xf32>
    %72 = arith.addf %70, %71 : vector<2x128xf32>
    %73 = math.tanh %72 : vector<2x128xf32>
    %74 = arith.mulf %69, %73 : vector<2x128xf32>
    %75 = vector.extract_strided_slice %14 {offsets = [4, 0], sizes = [2, 512], strides = [1, 1]} : vector<16x512xf32> to vector<2x512xf32>
    %cst_23 = arith.constant dense<0.000000e+00> : vector<2x512xf32>
    %76 = tpu.matmul %74, %16, %cst_23 {dimension_numbers = #tpu.dot_dimension_numbers<[1], [0], [0], [1], [0, 0, 1, 1], [], []>} : vector<2x128xf32>, vector<128x512xf32>, vector<2x512xf32> -> vector<2x512xf32>
    %77 = arith.addf %75, %76 : vector<2x512xf32>
    %78 = vector.extract_strided_slice %77 {offsets = [0, 0], sizes = [2, 128], strides = [1, 1]} : vector<2x512xf32> to vector<2x128xf32>
    %79 = arith.negf %78 : vector<2x128xf32>
    %80 = math.exp %79 : vector<2x128xf32>
    %cst_24 = arith.constant 1.000000e+00 : f32
    %81 = vector.broadcast %cst_24 : f32 to vector<2x128xf32>
    %82 = arith.addf %81, %80 : vector<2x128xf32>
    %83 = arith.divf %81, %82 : vector<2x128xf32>
    %84 = vector.extract_strided_slice %77 {offsets = [0, 128], sizes = [2, 128], strides = [1, 1]} : vector<2x512xf32> to vector<2x128xf32>
    %85 = arith.negf %84 : vector<2x128xf32>
    %86 = math.exp %85 : vector<2x128xf32>
    %cst_25 = arith.constant 1.000000e+00 : f32
    %87 = vector.broadcast %cst_25 : f32 to vector<2x128xf32>
    %88 = arith.addf %87, %86 : vector<2x128xf32>
    %89 = arith.divf %87, %88 : vector<2x128xf32>
    %90 = vector.extract_strided_slice %77 {offsets = [0, 256], sizes = [2, 128], strides = [1, 1]} : vector<2x512xf32> to vector<2x128xf32>
    %91 = math.tanh %90 : vector<2x128xf32>
    %92 = vector.extract_strided_slice %77 {offsets = [0, 384], sizes = [2, 128], strides = [1, 1]} : vector<2x512xf32> to vector<2x128xf32>
    %93 = arith.negf %92 : vector<2x128xf32>
    %94 = math.exp %93 : vector<2x128xf32>
    %cst_26 = arith.constant 1.000000e+00 : f32
    %95 = vector.broadcast %cst_26 : f32 to vector<2x128xf32>
    %96 = arith.addf %95, %94 : vector<2x128xf32>
    %97 = arith.divf %95, %96 : vector<2x128xf32>
    %98 = arith.mulf %89, %72 : vector<2x128xf32>
    %99 = arith.mulf %83, %91 : vector<2x128xf32>
    %100 = arith.addf %98, %99 : vector<2x128xf32>
    %101 = math.tanh %100 : vector<2x128xf32>
    %102 = arith.mulf %97, %101 : vector<2x128xf32>
    %103 = vector.extract_strided_slice %14 {offsets = [6, 0], sizes = [2, 512], strides = [1, 1]} : vector<16x512xf32> to vector<2x512xf32>
    %cst_27 = arith.constant dense<0.000000e+00> : vector<2x512xf32>
    %104 = tpu.matmul %102, %16, %cst_27 {dimension_numbers = #tpu.dot_dimension_numbers<[1], [0], [0], [1], [0, 0, 1, 1], [], []>} : vector<2x128xf32>, vector<128x512xf32>, vector<2x512xf32> -> vector<2x512xf32>
    %105 = arith.addf %103, %104 : vector<2x512xf32>
    %106 = vector.extract_strided_slice %105 {offsets = [0, 0], sizes = [2, 128], strides = [1, 1]} : vector<2x512xf32> to vector<2x128xf32>
    %107 = arith.negf %106 : vector<2x128xf32>
    %108 = math.exp %107 : vector<2x128xf32>
    %cst_28 = arith.constant 1.000000e+00 : f32
    %109 = vector.broadcast %cst_28 : f32 to vector<2x128xf32>
    %110 = arith.addf %109, %108 : vector<2x128xf32>
    %111 = arith.divf %109, %110 : vector<2x128xf32>
    %112 = vector.extract_strided_slice %105 {offsets = [0, 128], sizes = [2, 128], strides = [1, 1]} : vector<2x512xf32> to vector<2x128xf32>
    %113 = arith.negf %112 : vector<2x128xf32>
    %114 = math.exp %113 : vector<2x128xf32>
    %cst_29 = arith.constant 1.000000e+00 : f32
    %115 = vector.broadcast %cst_29 : f32 to vector<2x128xf32>
    %116 = arith.addf %115, %114 : vector<2x128xf32>
    %117 = arith.divf %115, %116 : vector<2x128xf32>
    %118 = vector.extract_strided_slice %105 {offsets = [0, 256], sizes = [2, 128], strides = [1, 1]} : vector<2x512xf32> to vector<2x128xf32>
    %119 = math.tanh %118 : vector<2x128xf32>
    %120 = vector.extract_strided_slice %105 {offsets = [0, 384], sizes = [2, 128], strides = [1, 1]} : vector<2x512xf32> to vector<2x128xf32>
    %121 = arith.negf %120 : vector<2x128xf32>
    %122 = math.exp %121 : vector<2x128xf32>
    %cst_30 = arith.constant 1.000000e+00 : f32
    %123 = vector.broadcast %cst_30 : f32 to vector<2x128xf32>
    %124 = arith.addf %123, %122 : vector<2x128xf32>
    %125 = arith.divf %123, %124 : vector<2x128xf32>
    %126 = arith.mulf %117, %100 : vector<2x128xf32>
    %127 = arith.mulf %111, %119 : vector<2x128xf32>
    %128 = arith.addf %126, %127 : vector<2x128xf32>
    %129 = math.tanh %128 : vector<2x128xf32>
    %130 = arith.mulf %125, %129 : vector<2x128xf32>
    %131 = vector.extract_strided_slice %14 {offsets = [8, 0], sizes = [2, 512], strides = [1, 1]} : vector<16x512xf32> to vector<2x512xf32>
    %cst_31 = arith.constant dense<0.000000e+00> : vector<2x512xf32>
    %132 = tpu.matmul %130, %16, %cst_31 {dimension_numbers = #tpu.dot_dimension_numbers<[1], [0], [0], [1], [0, 0, 1, 1], [], []>} : vector<2x128xf32>, vector<128x512xf32>, vector<2x512xf32> -> vector<2x512xf32>
    %133 = arith.addf %131, %132 : vector<2x512xf32>
    %134 = vector.extract_strided_slice %133 {offsets = [0, 0], sizes = [2, 128], strides = [1, 1]} : vector<2x512xf32> to vector<2x128xf32>
    %135 = arith.negf %134 : vector<2x128xf32>
    %136 = math.exp %135 : vector<2x128xf32>
    %cst_32 = arith.constant 1.000000e+00 : f32
    %137 = vector.broadcast %cst_32 : f32 to vector<2x128xf32>
    %138 = arith.addf %137, %136 : vector<2x128xf32>
    %139 = arith.divf %137, %138 : vector<2x128xf32>
    %140 = vector.extract_strided_slice %133 {offsets = [0, 128], sizes = [2, 128], strides = [1, 1]} : vector<2x512xf32> to vector<2x128xf32>
    %141 = arith.negf %140 : vector<2x128xf32>
    %142 = math.exp %141 : vector<2x128xf32>
    %cst_33 = arith.constant 1.000000e+00 : f32
    %143 = vector.broadcast %cst_33 : f32 to vector<2x128xf32>
    %144 = arith.addf %143, %142 : vector<2x128xf32>
    %145 = arith.divf %143, %144 : vector<2x128xf32>
    %146 = vector.extract_strided_slice %133 {offsets = [0, 256], sizes = [2, 128], strides = [1, 1]} : vector<2x512xf32> to vector<2x128xf32>
    %147 = math.tanh %146 : vector<2x128xf32>
    %148 = vector.extract_strided_slice %133 {offsets = [0, 384], sizes = [2, 128], strides = [1, 1]} : vector<2x512xf32> to vector<2x128xf32>
    %149 = arith.negf %148 : vector<2x128xf32>
    %150 = math.exp %149 : vector<2x128xf32>
    %cst_34 = arith.constant 1.000000e+00 : f32
    %151 = vector.broadcast %cst_34 : f32 to vector<2x128xf32>
    %152 = arith.addf %151, %150 : vector<2x128xf32>
    %153 = arith.divf %151, %152 : vector<2x128xf32>
    %154 = arith.mulf %145, %128 : vector<2x128xf32>
    %155 = arith.mulf %139, %147 : vector<2x128xf32>
    %156 = arith.addf %154, %155 : vector<2x128xf32>
    %157 = math.tanh %156 : vector<2x128xf32>
    %158 = arith.mulf %153, %157 : vector<2x128xf32>
    %159 = vector.extract_strided_slice %14 {offsets = [10, 0], sizes = [2, 512], strides = [1, 1]} : vector<16x512xf32> to vector<2x512xf32>
    %cst_35 = arith.constant dense<0.000000e+00> : vector<2x512xf32>
    %160 = tpu.matmul %158, %16, %cst_35 {dimension_numbers = #tpu.dot_dimension_numbers<[1], [0], [0], [1], [0, 0, 1, 1], [], []>} : vector<2x128xf32>, vector<128x512xf32>, vector<2x512xf32> -> vector<2x512xf32>
    %161 = arith.addf %159, %160 : vector<2x512xf32>
    %162 = vector.extract_strided_slice %161 {offsets = [0, 0], sizes = [2, 128], strides = [1, 1]} : vector<2x512xf32> to vector<2x128xf32>
    %163 = arith.negf %162 : vector<2x128xf32>
    %164 = math.exp %163 : vector<2x128xf32>
    %cst_36 = arith.constant 1.000000e+00 : f32
    %165 = vector.broadcast %cst_36 : f32 to vector<2x128xf32>
    %166 = arith.addf %165, %164 : vector<2x128xf32>
    %167 = arith.divf %165, %166 : vector<2x128xf32>
    %168 = vector.extract_strided_slice %161 {offsets = [0, 128], sizes = [2, 128], strides = [1, 1]} : vector<2x512xf32> to vector<2x128xf32>
    %169 = arith.negf %168 : vector<2x128xf32>
    %170 = math.exp %169 : vector<2x128xf32>
    %cst_37 = arith.constant 1.000000e+00 : f32
    %171 = vector.broadcast %cst_37 : f32 to vector<2x128xf32>
    %172 = arith.addf %171, %170 : vector<2x128xf32>
    %173 = arith.divf %171, %172 : vector<2x128xf32>
    %174 = vector.extract_strided_slice %161 {offsets = [0, 256], sizes = [2, 128], strides = [1, 1]} : vector<2x512xf32> to vector<2x128xf32>
    %175 = math.tanh %174 : vector<2x128xf32>
    %176 = vector.extract_strided_slice %161 {offsets = [0, 384], sizes = [2, 128], strides = [1, 1]} : vector<2x512xf32> to vector<2x128xf32>
    %177 = arith.negf %176 : vector<2x128xf32>
    %178 = math.exp %177 : vector<2x128xf32>
    %cst_38 = arith.constant 1.000000e+00 : f32
    %179 = vector.broadcast %cst_38 : f32 to vector<2x128xf32>
    %180 = arith.addf %179, %178 : vector<2x128xf32>
    %181 = arith.divf %179, %180 : vector<2x128xf32>
    %182 = arith.mulf %173, %156 : vector<2x128xf32>
    %183 = arith.mulf %167, %175 : vector<2x128xf32>
    %184 = arith.addf %182, %183 : vector<2x128xf32>
    %185 = math.tanh %184 : vector<2x128xf32>
    %186 = arith.mulf %181, %185 : vector<2x128xf32>
    %187 = vector.extract_strided_slice %14 {offsets = [12, 0], sizes = [2, 512], strides = [1, 1]} : vector<16x512xf32> to vector<2x512xf32>
    %cst_39 = arith.constant dense<0.000000e+00> : vector<2x512xf32>
    %188 = tpu.matmul %186, %16, %cst_39 {dimension_numbers = #tpu.dot_dimension_numbers<[1], [0], [0], [1], [0, 0, 1, 1], [], []>} : vector<2x128xf32>, vector<128x512xf32>, vector<2x512xf32> -> vector<2x512xf32>
    %189 = arith.addf %187, %188 : vector<2x512xf32>
    %190 = vector.extract_strided_slice %189 {offsets = [0, 0], sizes = [2, 128], strides = [1, 1]} : vector<2x512xf32> to vector<2x128xf32>
    %191 = arith.negf %190 : vector<2x128xf32>
    %192 = math.exp %191 : vector<2x128xf32>
    %cst_40 = arith.constant 1.000000e+00 : f32
    %193 = vector.broadcast %cst_40 : f32 to vector<2x128xf32>
    %194 = arith.addf %193, %192 : vector<2x128xf32>
    %195 = arith.divf %193, %194 : vector<2x128xf32>
    %196 = vector.extract_strided_slice %189 {offsets = [0, 128], sizes = [2, 128], strides = [1, 1]} : vector<2x512xf32> to vector<2x128xf32>
    %197 = arith.negf %196 : vector<2x128xf32>
    %198 = math.exp %197 : vector<2x128xf32>
    %cst_41 = arith.constant 1.000000e+00 : f32
    %199 = vector.broadcast %cst_41 : f32 to vector<2x128xf32>
    %200 = arith.addf %199, %198 : vector<2x128xf32>
    %201 = arith.divf %199, %200 : vector<2x128xf32>
    %202 = vector.extract_strided_slice %189 {offsets = [0, 256], sizes = [2, 128], strides = [1, 1]} : vector<2x512xf32> to vector<2x128xf32>
    %203 = math.tanh %202 : vector<2x128xf32>
    %204 = vector.extract_strided_slice %189 {offsets = [0, 384], sizes = [2, 128], strides = [1, 1]} : vector<2x512xf32> to vector<2x128xf32>
    %205 = arith.negf %204 : vector<2x128xf32>
    %206 = math.exp %205 : vector<2x128xf32>
    %cst_42 = arith.constant 1.000000e+00 : f32
    %207 = vector.broadcast %cst_42 : f32 to vector<2x128xf32>
    %208 = arith.addf %207, %206 : vector<2x128xf32>
    %209 = arith.divf %207, %208 : vector<2x128xf32>
    %210 = arith.mulf %201, %184 : vector<2x128xf32>
    %211 = arith.mulf %195, %203 : vector<2x128xf32>
    %212 = arith.addf %210, %211 : vector<2x128xf32>
    %213 = math.tanh %212 : vector<2x128xf32>
    %214 = arith.mulf %209, %213 : vector<2x128xf32>
    %215 = vector.extract_strided_slice %14 {offsets = [14, 0], sizes = [2, 512], strides = [1, 1]} : vector<16x512xf32> to vector<2x512xf32>
    %cst_43 = arith.constant dense<0.000000e+00> : vector<2x512xf32>
    %216 = tpu.matmul %214, %16, %cst_43 {dimension_numbers = #tpu.dot_dimension_numbers<[1], [0], [0], [1], [0, 0, 1, 1], [], []>} : vector<2x128xf32>, vector<128x512xf32>, vector<2x512xf32> -> vector<2x512xf32>
    %217 = arith.addf %215, %216 : vector<2x512xf32>
    %218 = vector.extract_strided_slice %217 {offsets = [0, 0], sizes = [2, 128], strides = [1, 1]} : vector<2x512xf32> to vector<2x128xf32>
    %219 = arith.negf %218 : vector<2x128xf32>
    %220 = math.exp %219 : vector<2x128xf32>
    %cst_44 = arith.constant 1.000000e+00 : f32
    %221 = vector.broadcast %cst_44 : f32 to vector<2x128xf32>
    %222 = arith.addf %221, %220 : vector<2x128xf32>
    %223 = arith.divf %221, %222 : vector<2x128xf32>
    %224 = vector.extract_strided_slice %217 {offsets = [0, 128], sizes = [2, 128], strides = [1, 1]} : vector<2x512xf32> to vector<2x128xf32>
    %225 = arith.negf %224 : vector<2x128xf32>
    %226 = math.exp %225 : vector<2x128xf32>
    %cst_45 = arith.constant 1.000000e+00 : f32
    %227 = vector.broadcast %cst_45 : f32 to vector<2x128xf32>
    %228 = arith.addf %227, %226 : vector<2x128xf32>
    %229 = arith.divf %227, %228 : vector<2x128xf32>
    %230 = vector.extract_strided_slice %217 {offsets = [0, 256], sizes = [2, 128], strides = [1, 1]} : vector<2x512xf32> to vector<2x128xf32>
    %231 = math.tanh %230 : vector<2x128xf32>
    %232 = vector.extract_strided_slice %217 {offsets = [0, 384], sizes = [2, 128], strides = [1, 1]} : vector<2x512xf32> to vector<2x128xf32>
    %233 = arith.negf %232 : vector<2x128xf32>
    %234 = math.exp %233 : vector<2x128xf32>
    %cst_46 = arith.constant 1.000000e+00 : f32
    %235 = vector.broadcast %cst_46 : f32 to vector<2x128xf32>
    %236 = arith.addf %235, %234 : vector<2x128xf32>
    %237 = arith.divf %235, %236 : vector<2x128xf32>
    %238 = arith.mulf %229, %212 : vector<2x128xf32>
    %239 = arith.mulf %223, %231 : vector<2x128xf32>
    %240 = arith.addf %238, %239 : vector<2x128xf32>
    %241 = math.tanh %240 : vector<2x128xf32>
    %242 = arith.mulf %237, %241 : vector<2x128xf32>
    %243 = arith.mulf %46, %242 : vector<2x128xf32>
    %cst_47 = arith.constant dense<0.000000e+00> : vector<2xf32>
    %244 = vector.multi_reduction <add>, %243, %cst_47 [1] : vector<2x128xf32> to vector<2xf32>
    %245 = vector.shape_cast %244 : vector<2xf32> to vector<2x1xf32>
    %246 = arith.mulf %74, %242 : vector<2x128xf32>
    %cst_48 = arith.constant dense<0.000000e+00> : vector<2xf32>
    %247 = vector.multi_reduction <add>, %246, %cst_48 [1] : vector<2x128xf32> to vector<2xf32>
    %248 = vector.shape_cast %247 : vector<2xf32> to vector<2x1xf32>
    %249 = arith.mulf %102, %242 : vector<2x128xf32>
    %cst_49 = arith.constant dense<0.000000e+00> : vector<2xf32>
    %250 = vector.multi_reduction <add>, %249, %cst_49 [1] : vector<2x128xf32> to vector<2xf32>
    %251 = vector.shape_cast %250 : vector<2xf32> to vector<2x1xf32>
    %252 = arith.mulf %130, %242 : vector<2x128xf32>
    %cst_50 = arith.constant dense<0.000000e+00> : vector<2xf32>
    %253 = vector.multi_reduction <add>, %252, %cst_50 [1] : vector<2x128xf32> to vector<2xf32>
    %254 = vector.shape_cast %253 : vector<2xf32> to vector<2x1xf32>
    %255 = arith.mulf %158, %242 : vector<2x128xf32>
    %cst_51 = arith.constant dense<0.000000e+00> : vector<2xf32>
    %256 = vector.multi_reduction <add>, %255, %cst_51 [1] : vector<2x128xf32> to vector<2xf32>
    %257 = vector.shape_cast %256 : vector<2xf32> to vector<2x1xf32>
    %258 = arith.mulf %186, %242 : vector<2x128xf32>
    %cst_52 = arith.constant dense<0.000000e+00> : vector<2xf32>
    %259 = vector.multi_reduction <add>, %258, %cst_52 [1] : vector<2x128xf32> to vector<2xf32>
    %260 = vector.shape_cast %259 : vector<2xf32> to vector<2x1xf32>
    %261 = arith.mulf %214, %242 : vector<2x128xf32>
    %cst_53 = arith.constant dense<0.000000e+00> : vector<2xf32>
    %262 = vector.multi_reduction <add>, %261, %cst_53 [1] : vector<2x128xf32> to vector<2xf32>
    %263 = vector.shape_cast %262 : vector<2xf32> to vector<2x1xf32>
    %264 = arith.mulf %242, %242 : vector<2x128xf32>
    %cst_54 = arith.constant dense<0.000000e+00> : vector<2xf32>
    %265 = vector.multi_reduction <add>, %264, %cst_54 [1] : vector<2x128xf32> to vector<2xf32>
    %266 = vector.shape_cast %265 : vector<2xf32> to vector<2x1xf32>
    %267 = arith.maximumf %245, %248 : vector<2x1xf32>
    %268 = arith.maximumf %267, %251 : vector<2x1xf32>
    %269 = arith.maximumf %268, %254 : vector<2x1xf32>
    %270 = arith.maximumf %269, %257 : vector<2x1xf32>
    %271 = arith.maximumf %270, %260 : vector<2x1xf32>
    %272 = arith.maximumf %271, %263 : vector<2x1xf32>
    %273 = arith.maximumf %272, %266 : vector<2x1xf32>
    %274 = arith.subf %245, %273 : vector<2x1xf32>
    %275 = math.exp %274 : vector<2x1xf32>
    %276 = arith.subf %248, %273 : vector<2x1xf32>
    %277 = math.exp %276 : vector<2x1xf32>
    %278 = arith.subf %251, %273 : vector<2x1xf32>
    %279 = math.exp %278 : vector<2x1xf32>
    %280 = arith.subf %254, %273 : vector<2x1xf32>
    %281 = math.exp %280 : vector<2x1xf32>
    %282 = arith.subf %257, %273 : vector<2x1xf32>
    %283 = math.exp %282 : vector<2x1xf32>
    %284 = arith.subf %260, %273 : vector<2x1xf32>
    %285 = math.exp %284 : vector<2x1xf32>
    %286 = arith.subf %263, %273 : vector<2x1xf32>
    %287 = math.exp %286 : vector<2x1xf32>
    %288 = arith.subf %266, %273 : vector<2x1xf32>
    %289 = math.exp %288 : vector<2x1xf32>
    %290 = arith.addf %275, %277 : vector<2x1xf32>
    %291 = arith.addf %290, %279 : vector<2x1xf32>
    %292 = arith.addf %291, %281 : vector<2x1xf32>
    %293 = arith.addf %292, %283 : vector<2x1xf32>
    %294 = arith.addf %293, %285 : vector<2x1xf32>
    %295 = arith.addf %294, %287 : vector<2x1xf32>
    %296 = arith.addf %295, %289 : vector<2x1xf32>
    %297 = tpu.reciprocal %296 : vector<2x1xf32> -> vector<2x1xf32>
    %298 = arith.mulf %275, %297 : vector<2x1xf32>
    %299 = vector.broadcast %298 : vector<2x1xf32> to vector<2x128xf32>
    %300 = arith.mulf %46, %299 : vector<2x128xf32>
    %301 = arith.mulf %277, %297 : vector<2x1xf32>
    %302 = vector.broadcast %301 : vector<2x1xf32> to vector<2x128xf32>
    %303 = arith.mulf %74, %302 : vector<2x128xf32>
    %304 = arith.addf %300, %303 : vector<2x128xf32>
    %305 = arith.mulf %279, %297 : vector<2x1xf32>
    %306 = vector.broadcast %305 : vector<2x1xf32> to vector<2x128xf32>
    %307 = arith.mulf %102, %306 : vector<2x128xf32>
    %308 = arith.addf %304, %307 : vector<2x128xf32>
    %309 = arith.mulf %281, %297 : vector<2x1xf32>
    %310 = vector.broadcast %309 : vector<2x1xf32> to vector<2x128xf32>
    %311 = arith.mulf %130, %310 : vector<2x128xf32>
    %312 = arith.addf %308, %311 : vector<2x128xf32>
    %313 = arith.mulf %283, %297 : vector<2x1xf32>
    %314 = vector.broadcast %313 : vector<2x1xf32> to vector<2x128xf32>
    %315 = arith.mulf %158, %314 : vector<2x128xf32>
    %316 = arith.addf %312, %315 : vector<2x128xf32>
    %317 = arith.mulf %285, %297 : vector<2x1xf32>
    %318 = vector.broadcast %317 : vector<2x1xf32> to vector<2x128xf32>
    %319 = arith.mulf %186, %318 : vector<2x128xf32>
    %320 = arith.addf %316, %319 : vector<2x128xf32>
    %321 = arith.mulf %287, %297 : vector<2x1xf32>
    %322 = vector.broadcast %321 : vector<2x1xf32> to vector<2x128xf32>
    %323 = arith.mulf %214, %322 : vector<2x128xf32>
    %324 = arith.addf %320, %323 : vector<2x128xf32>
    %325 = arith.mulf %289, %297 : vector<2x1xf32>
    %326 = vector.broadcast %325 : vector<2x1xf32> to vector<2x128xf32>
    %327 = arith.mulf %242, %326 : vector<2x128xf32>
    %328 = arith.addf %324, %327 : vector<2x128xf32>
    %cst_55 = arith.constant 0.000000e+00 : f32
    %329 = vector.broadcast %cst_55 : f32 to vector<2x128xf32>
    %330 = arith.maximumf %328, %329 : vector<2x128xf32>
    %c0_56 = arith.constant 0 : index
    %c0_57 = arith.constant 0 : index
    %331 = vector.load %arg6[%c0_56, %c0_57] : memref<128x128xbf16, #tpu.memory_space<vmem>>, vector<128x128xbf16>
    %332 = arith.extf %331 : vector<128x128xbf16> to vector<128x128xf32>
    %cst_58 = arith.constant dense<0.000000e+00> : vector<2x128xf32>
    %333 = tpu.matmul %330, %332, %cst_58 {dimension_numbers = #tpu.dot_dimension_numbers<[1], [0], [0], [1], [0, 0, 1, 1], [], []>} : vector<2x128xf32>, vector<128x128xf32>, vector<2x128xf32> -> vector<2x128xf32>
    %c0_59 = arith.constant 0 : index
    %c0_60 = arith.constant 0 : index
    %334 = vector.load %arg7[%c0_59, %c0_60] : memref<1x128xf32, #tpu.memory_space<vmem>>, vector<1x128xf32>
    %335 = vector.broadcast %334 : vector<1x128xf32> to vector<2x128xf32>
    %336 = arith.addf %333, %335 : vector<2x128xf32>
    %c0_61 = arith.constant 0 : index
    %c0_62 = arith.constant 0 : index
    %337 = vector.load %arg8[%c0_61, %c0_62] : memref<2x128xf32, #tpu.memory_space<vmem>>, vector<2x128xf32>
    tpu.vector_store %arg8[%c0_61, %c0_62], %336 {strides = array<i32>} : memref<2x128xf32, #tpu.memory_space<vmem>>, vector<2x128xf32>,
    return
  }
}

</mosaic_0001>

<llo_original>
// kernel: critic_forward.1
$region0: #{critic_forward.1}
  #allocation0 [shape = 'u32[]', space=smem, size = 0x4, offset = 0x4, fixed_abs, tag = 'smem constant byte address 0x4 - core index']
  #allocation1 [shape = 'u32[144,128]{1,0:T(1,128)}', space=vmem, size = 0x12000, scoped, tag = 'internal scratch']
  %s0 = inlined_call_operand.vmem [shape: f32[16,16], index: 0, kind: input, shape index: {}]
  %s1 = inlined_call_operand.vmem [shape: bf16[16,64], index: 1, kind: input, shape index: {}]
  %s2 = inlined_call_operand.vmem [shape: f32[1,64], index: 2, kind: input, shape index: {}]
  %s3 = inlined_call_operand.hbm [shape: bf16[64,512], index: 3, kind: input, shape index: {}]
  %s4 = inlined_call_operand.hbm [shape: bf16[128,512], index: 4, kind: input, shape index: {}]
  %s5 = inlined_call_operand.vmem [shape: f32[1,512], index: 5, kind: input, shape index: {}]
  %s6 = inlined_call_operand.vmem [shape: bf16[128,128], index: 6, kind: input, shape index: {}]
  %s7 = inlined_call_operand.vmem [shape: f32[1,128], index: 7, kind: input, shape index: {}]
  %s8 = inlined_call_operand.hbm [shape: f32[2,128], index: 8, kind: output, shape index: {}]
  %s9 = sld [smem:[#allocation0]]
  $region50: #{critic_forward.1} parent=0
    _
  %s11 = ssub.s32 1, %s9
  %s12 = scalar_select 0, %s11, %s9
  $region1: #{critic_forward.1} parent=0
    #allocation2 [shape = 'u8[65536]{0}', space=vmem, size = 0x10000, scoped, tag = 'input window, operand 3, single buffered']
    #allocation3 [shape = 's32[1]{0}', space=sflag, size = 0x4, scoped, tag = 'scoped memory for critic_forward.1']
    #allocation4 [shape = 's32[1]{0}', space=sflag, size = 0x4, scoped, tag = 'scoped memory for critic_forward.1']
    #allocation5 [shape = 'u8[131072]{0}', space=vmem, size = 0x20000, scoped, tag = 'input window, operand 4, single buffered']
    #allocation6 [shape = 's32[1]{0}', space=sflag, size = 0x4, scoped, tag = 'scoped memory for critic_forward.1']
    #allocation7 [shape = 'u8[1024]{0}', space=vmem, size = 0x400, scoped, tag = 'output window, operand 0, single buffered']
    %13 = vsyncpa [#allocation3], 0
    %14 = vsyncpa [#allocation6], 0
    %15 = vsyncpa [#allocation4], 0
    // Predicated region
    $region2: #{critic_forward.1} parent=1 // pred_check
      _
    $region3: #{critic_forward.1} parent=1 // pred_check_branch
      %17 = sbr.rel (0) target = $region5
    $region4: #{critic_forward.1} parent=1 // pred_region
      _
    $region5: #{critic_forward.1} parent=1 // pred_fallthru
      _
    // Predicated region
    $region6: #{critic_forward.1} parent=1 // pred_check
      _
    $region7: #{critic_forward.1} parent=1 // pred_check_branch
      %19 = sbr.rel (0) target = $region9
    $region8: #{critic_forward.1} parent=1 // pred_region
      _
    $region9: #{critic_forward.1} parent=1 // pred_fallthru
      _
    // Predicated region
    $region10: #{critic_forward.1} parent=1 // pred_check
      _
    $region11: #{critic_forward.1} parent=1 // pred_check_branch
      %21 = sbr.rel (0) target = $region13
    $region12: #{critic_forward.1} parent=1 // pred_region
      _
    $region13: #{critic_forward.1} parent=1 // pred_fallthru
      _
    // Predicated region
    $region14: #{critic_forward.1} parent=1 // pred_check
      _
    $region15: #{critic_forward.1} parent=1 // pred_check_branch
      %23 = sbr.rel (0) target = $region17
    $region16: #{critic_forward.1} parent=1 // pred_region
      %s25 = ssub.s32 2048, 2048
      %26 = vsyncadd [#allocation3], %s25
      %s27 = sshll.u32 [#allocation2], 4
      %s28 = int_to_ptr.vmem [resolvable:$true] %s27
      %33 = dma.hbm_to_vmem [thread:$0]  %s3, 2048, %s28, [#allocation3], 256, 256, 16
    $region17: #{critic_forward.1} parent=1 // pred_fallthru
      _
    // Predicated region
    $region18: #{critic_forward.1} parent=1 // pred_check
      _
    $region19: #{critic_forward.1} parent=1 // pred_check_branch
      %35 = sbr.rel (0) target = $region21
    $region20: #{critic_forward.1} parent=1 // pred_region
      %s37 = ssub.s32 4096, 4096
      %38 = vsyncadd [#allocation6], %s37
      %s39 = sshll.u32 [#allocation5], 4
      %s40 = int_to_ptr.vmem [resolvable:$true] %s39
      %45 = dma.hbm_to_vmem [thread:$0]  %s4, 4096, %s40, [#allocation6], 256, 256, 16
    $region21: #{critic_forward.1} parent=1 // pred_fallthru
      _
    // Predicated region
    $region22: #{critic_forward.1} parent=1 // pred_check
      _
    $region23: #{critic_forward.1} parent=1 // pred_check_branch
      %47 = sbr.rel (0) target = $region25
    $region24: #{critic_forward.1} parent=1 // pred_region
      _
    $region25: #{critic_forward.1} parent=1 // pred_fallthru
      _
    // Predicated region
    $region26: #{critic_forward.1} parent=1 // pred_check
      _
    $region27: #{critic_forward.1} parent=1 // pred_check_branch
      %49 = sbr.rel (0) target = $region29
    $region28: #{critic_forward.1} parent=1 // pred_region
      _
    $region29: #{critic_forward.1} parent=1 // pred_fallthru
      _
    // Predicated region
    $region30: #{critic_forward.1} parent=1 // pred_check
      _
    $region31: #{critic_forward.1} parent=1 // pred_check_branch
      %51 = sbr.rel (0) target = $region33
    $region32: #{critic_forward.1} parent=1 // pred_region
      _
    $region33: #{critic_forward.1} parent=1 // pred_fallthru
      _
    // Predicated region
    $region34: #{critic_forward.1} parent=1 // pred_check
      _
    $region35: #{critic_forward.1} parent=1 // pred_check_branch
      %53 = sbr.rel (0) target = $region37
    $region36: #{critic_forward.1} parent=1 // pred_region
      %54 = dma.done [#allocation3], 2048
    $region37: #{critic_forward.1} parent=1 // pred_fallthru
      _
    // Predicated region
    $region38: #{critic_forward.1} parent=1 // pred_check
      _
    $region39: #{critic_forward.1} parent=1 // pred_check_branch
      %56 = sbr.rel (0) target = $region41
    $region40: #{critic_forward.1} parent=1 // pred_region
      %57 = dma.done [#allocation6], 4096
    $region41: #{critic_forward.1} parent=1 // pred_fallthru
      _
    %v58 = vld [vmem:[%s1] sm:$0xf]
    %v59 = vld [vmem:[%s1 + $0x4] sm:$0xf]
    %v60 = vunpack.c.l.bf16 %v58
    %v61 = vunpack.c.l.bf16 %v59
    %v62 = vld [vmem:[%s0] sm:$0xff]
    %v63 = vld [vmem:[%s0 + $0x8] sm:$0xff]
    %v64 = vld [vmem:[%s2] sm:$0x1]
    %v66 = vlaneseq
    %v67 = vshrl.u32 %v66, 7
    %v68 = vsub.s32 0, %v67
    %v69 = vrot.slane %v64, %v68
    %vm71 = vcmask 130048
    %v73 = vsel %vm71, %v62, 0
    %v76 = vsel %vm71, %v63, 0
    %78 = vmatprep.subr.mxu0 0.0
    %79 = vmatpush1.msra.mxu0 0.0
    %80 = vmatprep.subr.mxu0 0.0
    %81 = vmatpush1.msra.mxu0 0.0
    %82 = vmatprep.subr.mxu0 0.0
    %83 = vmatpush1.msra.mxu0 0.0
    %84 = vmatprep.subr.mxu0 0.0
    %85 = vmatpush1.msra.mxu0 0.0
    %86 = vmatprep.subr.mxu0 0.0
    %87 = vmatpush1.msra.mxu0 0.0
    %88 = vmatprep.subr.mxu0 0.0
    %89 = vmatpush1.msra.mxu0 0.0
    %90 = vmatprep.subr.mxu0 0.0
    %91 = vmatpush1.msra.mxu0 0.0
    %92 = vmatprep.subr.mxu0 0.0
    %93 = vmatpush1.msra.mxu0 0.0
    %94 = vmatprep.subr.mxu0 0.0
    %95 = vmatpush1.msra.mxu0 0.0
    %96 = vmatprep.subr.mxu0 0.0
    %97 = vmatpush1.msra.mxu0 0.0
    %98 = vmatprep.subr.mxu0 0.0
    %99 = vmatpush1.msra.mxu0 0.0
    %100 = vmatprep.subr.mxu0 0.0
    %101 = vmatpush1.msra.mxu0 0.0
    %102 = vmatprep.subr.mxu0 0.0
    %103 = vmatpush1.msra.mxu0 0.0
    %104 = vmatprep.subr.mxu0 0.0
    %105 = vmatpush1.msra.mxu0 0.0
    %106 = vmatprep.subr.mxu0 0.0
    %107 = vmatpush1.msra.mxu0 %v61
    %108 = vmatprep.subr.mxu0 0.0
    %109 = vmatpush1.msra.mxu0 %v60
    %110 = vmatprep.subr.mxu0 0.0
    %111 = vmatpush2.msra.mxu0 0.0
    %112 = vmatprep.subr.mxu0 0.0
    %113 = vmatpush2.msra.mxu0 0.0
    %114 = vmatprep.subr.mxu0 0.0
    %115 = vmatpush2.msra.mxu0 0.0
    %116 = vmatprep.subr.mxu0 0.0
    %117 = vmatpush2.msra.mxu0 0.0
    %118 = vmatprep.subr.mxu0 0.0
    %119 = vmatpush2.msra.mxu0 0.0
    %120 = vmatprep.subr.mxu0 0.0
    %121 = vmatpush2.msra.mxu0 0.0
    %122 = vmatprep.subr.mxu0 0.0
    %123 = vmatpush2.msra.mxu0 0.0
    %124 = vmatprep.subr.mxu0 0.0
    %125 = vmatpush2.msra.mxu0 0.0
    %126 = vmatprep.subr.mxu0 0.0
    %127 = vmatpush2.msra.mxu0 0.0
    %128 = vmatprep.subr.mxu0 0.0
    %129 = vmatpush2.msra.mxu0 0.0
    %130 = vmatprep.subr.mxu0 0.0
    %131 = vmatpush2.msra.mxu0 0.0
    %132 = vmatprep.subr.mxu0 0.0
    %133 = vmatpush2.msra.mxu0 0.0
    %134 = vmatprep.subr.mxu0 0.0
    %135 = vmatpush2.msra.mxu0 0.0
    %136 = vmatprep.subr.mxu0 0.0
    %137 = vmatpush2.msra.mxu0 0.0
    %138 = vmatprep.subr.mxu0 0.0
    %139 = vmatpush2.msra.mxu0 0.0
    %140 = vmatprep.subr.mxu0 0.0
    %141 = vmatpush2.msra.mxu0 0.0
    %142 = vmatprep.mubr.f32.mxu0 0.0
    %143 = vmatmul.mubr.f32.gmra.mxu0 %v73
    %v144 = vpop.f32.mrf.mxu0
    %v145 = vadd.f32 %v69, %v144
    %v146 = vpop.f32.mrf.mxu0
    %147 = vmatprep.mubr.f32.mxu0 0.0
    %148 = vmatmul.mubr.f32.gmra.mxu0 %v76
    %v149 = vpop.f32.mrf.mxu0
    %v150 = vadd.f32 %v69, %v149
    %v151 = vpop.f32.mrf.mxu0
    %152 = vdwg.mxu0
    %v153 = vmax.f32 %v145, 0.0
    %v154 = vmax.f32 %v150, 0.0
    %v155 = vld [vmem:[#allocation2] sm:$0xff]
    %v156 = vld [vmem:[#allocation2 + $0x8] sm:$0xff]
    %v157 = vld [vmem:[#allocation2 + $0x10] sm:$0xff]
    %v158 = vld [vmem:[#allocation2 + $0x18] sm:$0xff]
    %v159 = vld [vmem:[#allocation2 + $0x20] sm:$0xff]
    %v160 = vld [vmem:[#allocation2 + $0x28] sm:$0xff]
    %v161 = vld [vmem:[#allocation2 + $0x30] sm:$0xff]
    %v162 = vld [vmem:[#allocation2 + $0x38] sm:$0xff]
    %v163 = vld [vmem:[#allocation2 + $0x40] sm:$0xff]
    %v164 = vld [vmem:[#allocation2 + $0x48] sm:$0xff]
    %v165 = vld [vmem:[#allocation2 + $0x50] sm:$0xff]
    %v166 = vld [vmem:[#allocation2 + $0x58] sm:$0xff]
    %v167 = vld [vmem:[#allocation2 + $0x60] sm:$0xff]
    %v168 = vld [vmem:[#allocation2 + $0x68] sm:$0xff]
    %v169 = vld [vmem:[#allocation2 + $0x70] sm:$0xff]
    %v170 = vld [vmem:[#allocation2 + $0x78] sm:$0xff]
    %v171 = vunpack.c.l.bf16 %v155
    %v172 = vunpack.c.h.bf16 %v155
    %v173 = vunpack.c.l.bf16 %v156
    %v174 = vunpack.c.h.bf16 %v156
    %v175 = vunpack.c.l.bf16 %v157
    %v176 = vunpack.c.h.bf16 %v157
    %v177 = vunpack.c.l.bf16 %v158
    %v178 = vunpack.c.h.bf16 %v158
    %v179 = vunpack.c.l.bf16 %v159
    %v180 = vunpack.c.h.bf16 %v159
    %v181 = vunpack.c.l.bf16 %v160
    %v182 = vunpack.c.h.bf16 %v160
    %v183 = vunpack.c.l.bf16 %v161
    %v184 = vunpack.c.h.bf16 %v161
    %v185 = vunpack.c.l.bf16 %v162
    %v186 = vunpack.c.h.bf16 %v162
    %v187 = vunpack.c.l.bf16 %v163
    %v188 = vunpack.c.h.bf16 %v163
    %v189 = vunpack.c.l.bf16 %v164
    %v190 = vunpack.c.h.bf16 %v164
    %v191 = vunpack.c.l.bf16 %v165
    %v192 = vunpack.c.h.bf16 %v165
    %v193 = vunpack.c.l.bf16 %v166
    %v194 = vunpack.c.h.bf16 %v166
    %v195 = vunpack.c.l.bf16 %v167
    %v196 = vunpack.c.h.bf16 %v167
    %v197 = vunpack.c.l.bf16 %v168
    %v198 = vunpack.c.h.bf16 %v168
    %v199 = vunpack.c.l.bf16 %v169
    %v200 = vunpack.c.h.bf16 %v169
    %v201 = vunpack.c.l.bf16 %v170
    %v202 = vunpack.c.h.bf16 %v170
    %v203 = vld [vmem:[%s5] sm:$0xf]
    %v205 = vlaneseq
    %v206 = vshrl.u32 %v205, 7
    %v207 = vsub.s32 0, %v206
    %v208 = vrot.slane %v203, %v207
    %v209 = vlaneseq
    %v210 = vshrl.u32 %v209, 7
    %v211 = vsub.s32 1, %v210
    %v212 = vrot.slane %v203, %v211
    %v213 = vlaneseq
    %v214 = vshrl.u32 %v213, 7
    %v215 = vsub.s32 2, %v214
    %v216 = vrot.slane %v203, %v215
    %v217 = vlaneseq
    %v218 = vshrl.u32 %v217, 7
    %v219 = vsub.s32 3, %v218
    %v220 = vrot.slane %v203, %v219
    %vm225 = vcmask 523264
    %v227 = vsel %vm225, %v153, 0
    %v230 = vsel %vm225, %v154, 0
    %232 = vmatprep.subr.mxu0 0.0
    %233 = vmatpush1.msra.mxu0 0.0
    %234 = vmatprep.subr.mxu0 0.0
    %235 = vmatpush1.msra.mxu0 0.0
    %236 = vmatprep.subr.mxu0 0.0
    %237 = vmatpush1.msra.mxu0 0.0
    %238 = vmatprep.subr.mxu0 0.0
    %239 = vmatpush1.msra.mxu0 0.0
    %240 = vmatprep.subr.mxu0 0.0
    %241 = vmatpush1.msra.mxu0 0.0
    %242 = vmatprep.subr.mxu0 0.0
    %243 = vmatpush1.msra.mxu0 0.0
    %244 = vmatprep.subr.mxu0 0.0
    %245 = vmatpush1.msra.mxu0 0.0
    %246 = vmatprep.subr.mxu0 0.0
    %247 = vmatpush1.msra.mxu0 0.0
    %248 = vmatprep.subr.mxu0 %v200
    %249 = vmatpush1.msra.mxu0 %v199
    %250 = vmatprep.subr.mxu0 %v196
    %251 = vmatpush1.msra.mxu0 %v195
    %252 = vmatprep.subr.mxu0 %v192
    %253 = vmatpush1.msra.mxu0 %v191
    %254 = vmatprep.subr.mxu0 %v188
    %255 = vmatpush1.msra.mxu0 %v187
    %256 = vmatprep.subr.mxu0 %v184
    %257 = vmatpush1.msra.mxu0 %v183
    %258 = vmatprep.subr.mxu0 %v180
    %259 = vmatpush1.msra.mxu0 %v179
    %260 = vmatprep.subr.mxu0 %v176
    %261 = vmatpush1.msra.mxu0 %v175
    %262 = vmatprep.subr.mxu0 %v172
    %263 = vmatpush1.msra.mxu0 %v171
    %264 = vmatprep.subr.mxu0 0.0
    %265 = vmatpush2.msra.mxu0 0.0
    %266 = vmatprep.subr.mxu0 0.0
    %267 = vmatpush2.msra.mxu0 0.0
    %268 = vmatprep.subr.mxu0 0.0
    %269 = vmatpush2.msra.mxu0 0.0
    %270 = vmatprep.subr.mxu0 0.0
    %271 = vmatpush2.msra.mxu0 0.0
    %272 = vmatprep.subr.mxu0 0.0
    %273 = vmatpush2.msra.mxu0 0.0
    %274 = vmatprep.subr.mxu0 0.0
    %275 = vmatpush2.msra.mxu0 0.0
    %276 = vmatprep.subr.mxu0 0.0
    %277 = vmatpush2.msra.mxu0 0.0
    %278 = vmatprep.subr.mxu0 0.0
    %279 = vmatpush2.msra.mxu0 0.0
    %280 = vmatprep.subr.mxu0 0.0
    %281 = vmatpush2.msra.mxu0 0.0
    %282 = vmatprep.subr.mxu0 0.0
    %283 = vmatpush2.msra.mxu0 0.0
    %284 = vmatprep.subr.mxu0 0.0
    %285 = vmatpush2.msra.mxu0 0.0
    %286 = vmatprep.subr.mxu0 0.0
    %287 = vmatpush2.msra.mxu0 0.0
    %288 = vmatprep.subr.mxu0 0.0
    %289 = vmatpush2.msra.mxu0 0.0
    %290 = vmatprep.subr.mxu0 0.0
    %291 = vmatpush2.msra.mxu0 0.0
    %292 = vmatprep.subr.mxu0 0.0
    %293 = vmatpush2.msra.mxu0 0.0
    %294 = vmatprep.subr.mxu0 0.0
    %295 = vmatpush2.msra.mxu0 0.0
    %296 = vmatprep.mubr.f32.mxu0 0.0
    %297 = vmatmul.mubr.f32.gmra.mxu0 %v227
    %v298 = vpop.f32.mrf.mxu0
    %v299 = vadd.f32 %v208, %v298
    %v300 = vpop.f32.mrf.mxu0
    %v301 = vadd.f32 %v212, %v300
    %302 = vmatprep.mubr.f32.mxu0 0.0
    %303 = vmatmul.mubr.f32.gmra.mxu0 %v230
    %v304 = vpop.f32.mrf.mxu0
    %v305 = vadd.f32 %v208, %v304
    %v306 = vpop.f32.mrf.mxu0
    %v307 = vadd.f32 %v212, %v306
    %308 = vdwg.mxu0
    %309 = vmatprep.subr.mxu0 0.0
    %310 = vmatpush1.msra.mxu0 0.0
    %311 = vmatprep.subr.mxu0 0.0
    %312 = vmatpush1.msra.mxu0 0.0
    %313 = vmatprep.subr.mxu0 0.0
    %314 = vmatpush1.msra.mxu0 0.0
    %315 = vmatprep.subr.mxu0 0.0
    %316 = vmatpush1.msra.mxu0 0.0
    %317 = vmatprep.subr.mxu0 0.0
    %318 = vmatpush1.msra.mxu0 0.0
    %319 = vmatprep.subr.mxu0 0.0
    %320 = vmatpush1.msra.mxu0 0.0
    %321 = vmatprep.subr.mxu0 0.0
    %322 = vmatpush1.msra.mxu0 0.0
    %323 = vmatprep.subr.mxu0 0.0
    %324 = vmatpush1.msra.mxu0 0.0
    %325 = vmatprep.subr.mxu0 %v202
    %326 = vmatpush1.msra.mxu0 %v201
    %327 = vmatprep.subr.mxu0 %v198
    %328 = vmatpush1.msra.mxu0 %v197
    %329 = vmatprep.subr.mxu0 %v194
    %330 = vmatpush1.msra.mxu0 %v193
    %331 = vmatprep.subr.mxu0 %v190
    %332 = vmatpush1.msra.mxu0 %v189
    %333 = vmatprep.subr.mxu0 %v186
    %334 = vmatpush1.msra.mxu0 %v185
    %335 = vmatprep.subr.mxu0 %v182
    %336 = vmatpush1.msra.mxu0 %v181
    %337 = vmatprep.subr.mxu0 %v178
    %338 = vmatpush1.msra.mxu0 %v177
    %339 = vmatprep.subr.mxu0 %v174
    %340 = vmatpush1.msra.mxu0 %v173
    %341 = vmatprep.subr.mxu0 0.0
    %342 = vmatpush2.msra.mxu0 0.0
    %343 = vmatprep.subr.mxu0 0.0
    %344 = vmatpush2.msra.mxu0 0.0
    %345 = vmatprep.subr.mxu0 0.0
    %346 = vmatpush2.msra.mxu0 0.0
    %347 = vmatprep.subr.mxu0 0.0
    %348 = vmatpush2.msra.mxu0 0.0
    %349 = vmatprep.subr.mxu0 0.0
    %350 = vmatpush2.msra.mxu0 0.0
    %351 = vmatprep.subr.mxu0 0.0
    %352 = vmatpush2.msra.mxu0 0.0
    %353 = vmatprep.subr.mxu0 0.0
    %354 = vmatpush2.msra.mxu0 0.0
    %355 = vmatprep.subr.mxu0 0.0
    %356 = vmatpush2.msra.mxu0 0.0
    %357 = vmatprep.subr.mxu0 0.0
    %358 = vmatpush2.msra.mxu0 0.0
    %359 = vmatprep.subr.mxu0 0.0
    %360 = vmatpush2.msra.mxu0 0.0
    %361 = vmatprep.subr.mxu0 0.0
    %362 = vmatpush2.msra.mxu0 0.0
    %363 = vmatprep.subr.mxu0 0.0
    %364 = vmatpush2.msra.mxu0 0.0
    %365 = vmatprep.subr.mxu0 0.0
    %366 = vmatpush2.msra.mxu0 0.0
    %367 = vmatprep.subr.mxu0 0.0
    %368 = vmatpush2.msra.mxu0 0.0
    %369 = vmatprep.subr.mxu0 0.0
    %370 = vmatpush2.msra.mxu0 0.0
    %371 = vmatprep.subr.mxu0 0.0
    %372 = vmatpush2.msra.mxu0 0.0
    %373 = vmatprep.mubr.f32.mxu0 0.0
    %374 = vmatmul.mubr.f32.gmra.mxu0 %v227
    %v375 = vpop.f32.mrf.mxu0
    %v376 = vadd.f32 %v216, %v375
    %v377 = vpop.f32.mrf.mxu0
    %v378 = vadd.f32 %v220, %v377
    %379 = vmatprep.mubr.f32.mxu0 0.0
    %380 = vmatmul.mubr.f32.gmra.mxu0 %v230
    %v381 = vpop.f32.mrf.mxu0
    %v382 = vadd.f32 %v216, %v381
    %v383 = vpop.f32.mrf.mxu0
    %v384 = vadd.f32 %v220, %v383
    %385 = vdwg.mxu0
    %v386 = vld [vmem:[#allocation5] sm:$0xff]
    %v387 = vld [vmem:[#allocation5 + $0x8] sm:$0xff]
    %v388 = vld [vmem:[#allocation5 + $0x10] sm:$0xff]
    %v389 = vld [vmem:[#allocation5 + $0x18] sm:$0xff]
    %v390 = vld [vmem:[#allocation5 + $0x20] sm:$0xff]
    %v391 = vld [vmem:[#allocation5 + $0x28] sm:$0xff]
    %v392 = vld [vmem:[#allocation5 + $0x30] sm:$0xff]
    %v393 = vld [vmem:[#allocation5 + $0x38] sm:$0xff]
    %v394 = vld [vmem:[#allocation5 + $0x40] sm:$0xff]
    %v395 = vld [vmem:[#allocation5 + $0x48] sm:$0xff]
    %v396 = vld [vmem:[#allocation5 + $0x50] sm:$0xff]
    %v397 = vld [vmem:[#allocation5 + $0x58] sm:$0xff]
    %v398 = vld [vmem:[#allocation5 + $0x60] sm:$0xff]
    %v399 = vld [vmem:[#allocation5 + $0x68] sm:$0xff]
    %v400 = vld [vmem:[#allocation5 + $0x70] sm:$0xff]
    %v401 = vld [vmem:[#allocation5 + $0x78] sm:$0xff]
    %v402 = vld [vmem:[#allocation5 + $0x80] sm:$0xff]
    %v403 = vld [vmem:[#allocation5 + $0x88] sm:$0xff]
    %v404 = vld [vmem:[#allocation5 + $0x90] sm:$0xff]
    %v405 = vld [vmem:[#allocation5 + $0x98] sm:$0xff]
    %v406 = vld [vmem:[#allocation5 + $0xa0] sm:$0xff]
    %v407 = vld [vmem:[#allocation5 + $0xa8] sm:$0xff]
    %v408 = vld [vmem:[#allocation5 + $0xb0] sm:$0xff]
    %v409 = vld [vmem:[#allocation5 + $0xb8] sm:$0xff]
    %v410 = vld [vmem:[#allocation5 + $0xc0] sm:$0xff]
    %v411 = vld [vmem:[#allocation5 + $0xc8] sm:$0xff]
    %v412 = vld [vmem:[#allocation5 + $0xd0] sm:$0xff]
    %v413 = vld [vmem:[#allocation5 + $0xd8] sm:$0xff]
    %v414 = vld [vmem:[#allocation5 + $0xe0] sm:$0xff]
    %v415 = vld [vmem:[#allocation5 + $0xe8] sm:$0xff]
    %v416 = vld [vmem:[#allocation5 + $0xf0] sm:$0xff]
    %v417 = vld [vmem:[#allocation5 + $0xf8] sm:$0xff]
    %v418 = vunpack.c.l.bf16 %v386
    %v419 = vunpack.c.h.bf16 %v386
    %v420 = vunpack.c.l.bf16 %v387
    %v421 = vunpack.c.h.bf16 %v387
    %v422 = vunpack.c.l.bf16 %v388
    %v423 = vunpack.c.h.bf16 %v388
    %v424 = vunpack.c.l.bf16 %v389
    %v425 = vunpack.c.h.bf16 %v389
    %v426 = vunpack.c.l.bf16 %v390
    %v427 = vunpack.c.h.bf16 %v390
    %v428 = vunpack.c.l.bf16 %v391
    %v429 = vunpack.c.h.bf16 %v391
    %v430 = vunpack.c.l.bf16 %v392
    %v431 = vunpack.c.h.bf16 %v392
    %v432 = vunpack.c.l.bf16 %v393
    %v433 = vunpack.c.h.bf16 %v393
    %v434 = vunpack.c.l.bf16 %v394
    %v435 = vunpack.c.h.bf16 %v394
    %v436 = vunpack.c.l.bf16 %v395
    %v437 = vunpack.c.h.bf16 %v395
    %v438 = vunpack.c.l.bf16 %v396
    %v439 = vunpack.c.h.bf16 %v396
    %v440 = vunpack.c.l.bf16 %v397
    %v441 = vunpack.c.h.bf16 %v397
    %v442 = vunpack.c.l.bf16 %v398
    %v443 = vunpack.c.h.bf16 %v398
    %v444 = vunpack.c.l.bf16 %v399
    %v445 = vunpack.c.h.bf16 %v399
    %v446 = vunpack.c.l.bf16 %v400
    %v447 = vunpack.c.h.bf16 %v400
    %v448 = vunpack.c.l.bf16 %v401
    %v449 = vunpack.c.h.bf16 %v401
    %v450 = vunpack.c.l.bf16 %v402
    %v451 = vunpack.c.h.bf16 %v402
    %v452 = vunpack.c.l.bf16 %v403
    %v453 = vunpack.c.h.bf16 %v403
    %v454 = vunpack.c.l.bf16 %v404
    %v455 = vunpack.c.h.bf16 %v404
    %v456 = vunpack.c.l.bf16 %v405
    %v457 = vunpack.c.h.bf16 %v405
    %v458 = vunpack.c.l.bf16 %v406
    %v459 = vunpack.c.h.bf16 %v406
    %v460 = vunpack.c.l.bf16 %v407
    %v461 = vunpack.c.h.bf16 %v407
    %v462 = vunpack.c.l.bf16 %v408
    %v463 = vunpack.c.h.bf16 %v408
    %v464 = vunpack.c.l.bf16 %v409
    %v465 = vunpack.c.h.bf16 %v409
    %v466 = vunpack.c.l.bf16 %v410
    %v467 = vunpack.c.h.bf16 %v410
    %v468 = vunpack.c.l.bf16 %v411
    %v469 = vunpack.c.h.bf16 %v411
    %v470 = vunpack.c.l.bf16 %v412
    %v471 = vunpack.c.h.bf16 %v412
    %v472 = vunpack.c.l.bf16 %v413
    %v473 = vunpack.c.h.bf16 %v413
    %v474 = vunpack.c.l.bf16 %v414
    %v475 = vunpack.c.h.bf16 %v414
    %v476 = vunpack.c.l.bf16 %v415
    %v477 = vunpack.c.h.bf16 %v415
    %v478 = vunpack.c.l.bf16 %v416
    %v479 = vunpack.c.h.bf16 %v416
    %v480 = vunpack.c.l.bf16 %v417
    %v481 = vunpack.c.h.bf16 %v417
    %482 = vmatprep.subr.mxu0 %v479
    %483 = vmatpush1.msra.mxu0 %v478
    %484 = vmatprep.subr.mxu0 %v475
    %485 = vmatpush1.msra.mxu0 %v474
    %486 = vmatprep.subr.mxu0 %v471
    %487 = vmatpush1.msra.mxu0 %v470
    %488 = vmatprep.subr.mxu0 %v467
    %489 = vmatpush1.msra.mxu0 %v466
    %490 = vmatprep.subr.mxu0 %v463
    %491 = vmatpush1.msra.mxu0 %v462
    %492 = vmatprep.subr.mxu0 %v459
    %493 = vmatpush1.msra.mxu0 %v458
    %494 = vmatprep.subr.mxu0 %v455
    %495 = vmatpush1.msra.mxu0 %v454
    %496 = vmatprep.subr.mxu0 %v451
    %497 = vmatpush1.msra.mxu0 %v450
    %498 = vmatprep.subr.mxu0 %v447
    %499 = vmatpush1.msra.mxu0 %v446
    %500 = vmatprep.subr.mxu0 %v443
    %501 = vmatpush1.msra.mxu0 %v442
    %502 = vmatprep.subr.mxu0 %v439
    %503 = vmatpush1.msra.mxu0 %v438
    %504 = vmatprep.subr.mxu0 %v435
    %505 = vmatpush1.msra.mxu0 %v434
    %506 = vmatprep.subr.mxu0 %v431
    %507 = vmatpush1.msra.mxu0 %v430
    %508 = vmatprep.subr.mxu0 %v427
    %509 = vmatpush1.msra.mxu0 %v426
    %510 = vmatprep.subr.mxu0 %v423
    %511 = vmatpush1.msra.mxu0 %v422
    %512 = vmatprep.subr.mxu0 %v419
    %513 = vmatpush1.msra.mxu0 %v418
    %514 = vmatprep.subr.mxu0 0.0
    %515 = vmatpush2.msra.mxu0 0.0
    %516 = vmatprep.subr.mxu0 0.0
    %517 = vmatpush2.msra.mxu0 0.0
    %518 = vmatprep.subr.mxu0 0.0
    %519 = vmatpush2.msra.mxu0 0.0
    %520 = vmatprep.subr.mxu0 0.0
    %521 = vmatpush2.msra.mxu0 0.0
    %522 = vmatprep.subr.mxu0 0.0
    %523 = vmatpush2.msra.mxu0 0.0
    %524 = vmatprep.subr.mxu0 0.0
    %525 = vmatpush2.msra.mxu0 0.0
    %526 = vmatprep.subr.mxu0 0.0
    %527 = vmatpush2.msra.mxu0 0.0
    %528 = vmatprep.subr.mxu0 0.0
    %529 = vmatpush2.msra.mxu0 0.0
    %530 = vmatprep.subr.mxu0 0.0
    %531 = vmatpush2.msra.mxu0 0.0
    %532 = vmatprep.subr.mxu0 0.0
    %533 = vmatpush2.msra.mxu0 0.0
    %534 = vmatprep.subr.mxu0 0.0
    %535 = vmatpush2.msra.mxu0 0.0
    %536 = vmatprep.subr.mxu0 0.0
    %537 = vmatpush2.msra.mxu0 0.0
    %538 = vmatprep.subr.mxu0 0.0
    %539 = vmatpush2.msra.mxu0 0.0
    %540 = vmatprep.subr.mxu0 0.0
    %541 = vmatpush2.msra.mxu0 0.0
    %542 = vmatprep.subr.mxu0 0.0
    %543 = vmatpush2.msra.mxu0 0.0
    %544 = vmatprep.subr.mxu0 0.0
    %545 = vmatpush2.msra.mxu0 0.0
    %546 = vmatprep.mubr.f32.mxu0 0.0
    %547 = vmatmul.mubr.f32.gmra.mxu0 0.0
    %v548 = vpop.f32.mrf.mxu0
    %v549 = vadd.f32 0.0, %v548
    %v550 = vpop.f32.mrf.mxu0
    %v551 = vadd.f32 0.0, %v550
    %552 = vdwg.mxu0
    %553 = vmatprep.subr.mxu0 %v481
    %554 = vmatpush1.msra.mxu0 %v480
    %555 = vmatprep.subr.mxu0 %v477
    %556 = vmatpush1.msra.mxu0 %v476
    %557 = vmatprep.subr.mxu0 %v473
    %558 = vmatpush1.msra.mxu0 %v472
    %559 = vmatprep.subr.mxu0 %v469
    %560 = vmatpush1.msra.mxu0 %v468
    %561 = vmatprep.subr.mxu0 %v465
    %562 = vmatpush1.msra.mxu0 %v464
    %563 = vmatprep.subr.mxu0 %v461
    %564 = vmatpush1.msra.mxu0 %v460
    %565 = vmatprep.subr.mxu0 %v457
    %566 = vmatpush1.msra.mxu0 %v456
    %567 = vmatprep.subr.mxu0 %v453
    %568 = vmatpush1.msra.mxu0 %v452
    %569 = vmatprep.subr.mxu0 %v449
    %570 = vmatpush1.msra.mxu0 %v448
    %571 = vmatprep.subr.mxu0 %v445
    %572 = vmatpush1.msra.mxu0 %v444
    %573 = vmatprep.subr.mxu0 %v441
    %574 = vmatpush1.msra.mxu0 %v440
    %575 = vmatprep.subr.mxu0 %v437
    %576 = vmatpush1.msra.mxu0 %v436
    %577 = vmatprep.subr.mxu0 %v433
    %578 = vmatpush1.msra.mxu0 %v432
    %579 = vmatprep.subr.mxu0 %v429
    %580 = vmatpush1.msra.mxu0 %v428
    %581 = vmatprep.subr.mxu0 %v425
    %582 = vmatpush1.msra.mxu0 %v424
    %583 = vmatprep.subr.mxu0 %v421
    %584 = vmatpush1.msra.mxu0 %v420
    %585 = vmatprep.subr.mxu0 0.0
    %586 = vmatpush2.msra.mxu0 0.0
    %587 = vmatprep.subr.mxu0 0.0
    %588 = vmatpush2.msra.mxu0 0.0
    %589 = vmatprep.subr.mxu0 0.0
    %590 = vmatpush2.msra.mxu0 0.0
    %591 = vmatprep.subr.mxu0 0.0
    %592 = vmatpush2.msra.mxu0 0.0
    %593 = vmatprep.subr.mxu0 0.0
    %594 = vmatpush2.msra.mxu0 0.0
    %595 = vmatprep.subr.mxu0 0.0
    %596 = vmatpush2.msra.mxu0 0.0
    %597 = vmatprep.subr.mxu0 0.0
    %598 = vmatpush2.msra.mxu0 0.0
    %599 = vmatprep.subr.mxu0 0.0
    %600 = vmatpush2.msra.mxu0 0.0
    %601 = vmatprep.subr.mxu0 0.0
    %602 = vmatpush2.msra.mxu0 0.0
    %603 = vmatprep.subr.mxu0 0.0
    %604 = vmatpush2.msra.mxu0 0.0
    %605 = vmatprep.subr.mxu0 0.0
    %606 = vmatpush2.msra.mxu0 0.0
    %607 = vmatprep.subr.mxu0 0.0
    %608 = vmatpush2.msra.mxu0 0.0
    %609 = vmatprep.subr.mxu0 0.0
    %610 = vmatpush2.msra.mxu0 0.0
    %611 = vmatprep.subr.mxu0 0.0
    %612 = vmatpush2.msra.mxu0 0.0
    %613 = vmatprep.subr.mxu0 0.0
    %614 = vmatpush2.msra.mxu0 0.0
    %615 = vmatprep.subr.mxu0 0.0
    %616 = vmatpush2.msra.mxu0 0.0
    %617 = vmatprep.mubr.f32.mxu0 0.0
    %618 = vmatmul.mubr.f32.gmra.mxu0 0.0
    %v619 = vpop.f32.mrf.mxu0
    %v620 = vadd.f32 0.0, %v619
    %v621 = vpop.f32.mrf.mxu0
    %v622 = vadd.f32 0.0, %v621
    %623 = vdwg.mxu0
    %v624 = vadd.f32 %v299, %v549
    %v625 = vadd.f32 %v301, %v551
    %v626 = vadd.f32 %v376, %v620
    %v627 = vadd.f32 %v378, %v622
    %v628 = vxor.u32 %v624, 2147483648
    %v629 = vmul.f32 %v628, 1.442695
    %v630 = vpow.pop %v629
    %v631 = vadd.f32 %v630, 1.0
    %v632 = vrcp.pop %v631
    %v633 = vmul.f32 1.0, %v632
    %v634 = vxor.u32 %v625, 2147483648
    %v635 = vmul.f32 %v634, 1.442695
    %v636 = vpow.pop %v635
    %v637 = vadd.f32 %v636, 1.0
    %v638 = vrcp.pop %v637
    %v639 = vmul.f32 1.0, %v638
    %v640 = vtanh.pop %v626
    %v641 = vxor.u32 %v627, 2147483648
    %v642 = vmul.f32 %v641, 1.442695
    %v643 = vpow.pop %v642
    %v644 = vadd.f32 %v643, 1.0
    %v645 = vrcp.pop %v644
    %v646 = vmul.f32 1.0, %v645
    %v647 = vmul.f32 %v639, 0.0
    %v648 = vmul.f32 %v633, %v640
    %v649 = vadd.f32 %v647, %v648
    %v650 = vtanh.pop %v649
    %v651 = vmul.f32 %v646, %v650
    %652 = vmatprep.subr.mxu0 %v479
    %653 = vmatpush1.msra.mxu0 %v478
    %654 = vmatprep.subr.mxu0 %v475
    %655 = vmatpush1.msra.mxu0 %v474
    %656 = vmatprep.subr.mxu0 %v471
    %657 = vmatpush1.msra.mxu0 %v470
    %658 = vmatprep.subr.mxu0 %v467
    %659 = vmatpush1.msra.mxu0 %v466
    %660 = vmatprep.subr.mxu0 %v463
    %661 = vmatpush1.msra.mxu0 %v462
    %662 = vmatprep.subr.mxu0 %v459
    %663 = vmatpush1.msra.mxu0 %v458
    %664 = vmatprep.subr.mxu0 %v455
    %665 = vmatpush1.msra.mxu0 %v454
    %666 = vmatprep.subr.mxu0 %v451
    %667 = vmatpush1.msra.mxu0 %v450
    %668 = vmatprep.subr.mxu0 %v447
    %669 = vmatpush1.msra.mxu0 %v446
    %670 = vmatprep.subr.mxu0 %v443
    %671 = vmatpush1.msra.mxu0 %v442
    %672 = vmatprep.subr.mxu0 %v439
    %673 = vmatpush1.msra.mxu0 %v438
    %674 = vmatprep.subr.mxu0 %v435
    %675 = vmatpush1.msra.mxu0 %v434
    %676 = vmatprep.subr.mxu0 %v431
    %677 = vmatpush1.msra.mxu0 %v430
    %678 = vmatprep.subr.mxu0 %v427
    %679 = vmatpush1.msra.mxu0 %v426
    %680 = vmatprep.subr.mxu0 %v423
    %681 = vmatpush1.msra.mxu0 %v422
    %682 = vmatprep.subr.mxu0 %v419
    %683 = vmatpush1.msra.mxu0 %v418
    %684 = vmatprep.subr.mxu0 0.0
    %685 = vmatpush2.msra.mxu0 0.0
    %686 = vmatprep.subr.mxu0 0.0
    %687 = vmatpush2.msra.mxu0 0.0
    %688 = vmatprep.subr.mxu0 0.0
    %689 = vmatpush2.msra.mxu0 0.0
    %690 = vmatprep.subr.mxu0 0.0
    %691 = vmatpush2.msra.mxu0 0.0
    %692 = vmatprep.subr.mxu0 0.0
    %693 = vmatpush2.msra.mxu0 0.0
    %694 = vmatprep.subr.mxu0 0.0
    %695 = vmatpush2.msra.mxu0 0.0
    %696 = vmatprep.subr.mxu0 0.0
    %697 = vmatpush2.msra.mxu0 0.0
    %698 = vmatprep.subr.mxu0 0.0
    %699 = vmatpush2.msra.mxu0 0.0
    %700 = vmatprep.subr.mxu0 0.0
    %701 = vmatpush2.msra.mxu0 0.0
    %702 = vmatprep.subr.mxu0 0.0
    %703 = vmatpush2.msra.mxu0 0.0
    %704 = vmatprep.subr.mxu0 0.0
    %705 = vmatpush2.msra.mxu0 0.0
    %706 = vmatprep.subr.mxu0 0.0
    %707 = vmatpush2.msra.mxu0 0.0
    %708 = vmatprep.subr.mxu0 0.0
    %709 = vmatpush2.msra.mxu0 0.0
    %710 = vmatprep.subr.mxu0 0.0
    %711 = vmatpush2.msra.mxu0 0.0
    %712 = vmatprep.subr.mxu0 0.0
    %713 = vmatpush2.msra.mxu0 0.0
    %714 = vmatprep.subr.mxu0 0.0
    %715 = vmatpush2.msra.mxu0 0.0
    %716 = vmatprep.mubr.f32.mxu0 0.0
    %717 = vmatmul.mubr.f32.gmra.mxu0 %v651
    %v718 = vpop.f32.mrf.mxu0
    %v719 = vadd.f32 0.0, %v718
    %v720 = vpop.f32.mrf.mxu0
    %v721 = vadd.f32 0.0, %v720
    %722 = vdwg.mxu0
    %723 = vmatprep.subr.mxu0 %v481
    %724 = vmatpush1.msra.mxu0 %v480
    %725 = vmatprep.subr.mxu0 %v477
    %726 = vmatpush1.msra.mxu0 %v476
    %727 = vmatprep.subr.mxu0 %v473
    %728 = vmatpush1.msra.mxu0 %v472
    %729 = vmatprep.subr.mxu0 %v469
    %730 = vmatpush1.msra.mxu0 %v468
    %731 = vmatprep.subr.mxu0 %v465
    %732 = vmatpush1.msra.mxu0 %v464
    %733 = vmatprep.subr.mxu0 %v461
    %734 = vmatpush1.msra.mxu0 %v460
    %735 = vmatprep.subr.mxu0 %v457
    %736 = vmatpush1.msra.mxu0 %v456
    %737 = vmatprep.subr.mxu0 %v453
    %738 = vmatpush1.msra.mxu0 %v452
    %739 = vmatprep.subr.mxu0 %v449
    %740 = vmatpush1.msra.mxu0 %v448
    %741 = vmatprep.subr.mxu0 %v445
    %742 = vmatpush1.msra.mxu0 %v444
    %743 = vmatprep.subr.mxu0 %v441
    %744 = vmatpush1.msra.mxu0 %v440
    %745 = vmatprep.subr.mxu0 %v437
    %746 = vmatpush1.msra.mxu0 %v436
    %747 = vmatprep.subr.mxu0 %v433
    %748 = vmatpush1.msra.mxu0 %v432
    %749 = vmatprep.subr.mxu0 %v429
    %750 = vmatpush1.msra.mxu0 %v428
    %751 = vmatprep.subr.mxu0 %v425
    %752 = vmatpush1.msra.mxu0 %v424
    %753 = vmatprep.subr.mxu0 %v421
    %754 = vmatpush1.msra.mxu0 %v420
    %755 = vmatprep.subr.mxu0 0.0
    %756 = vmatpush2.msra.mxu0 0.0
    %757 = vmatprep.subr.mxu0 0.0
    %758 = vmatpush2.msra.mxu0 0.0
    %759 = vmatprep.subr.mxu0 0.0
    %760 = vmatpush2.msra.mxu0 0.0
    %761 = vmatprep.subr.mxu0 0.0
    %762 = vmatpush2.msra.mxu0 0.0
    %763 = vmatprep.subr.mxu0 0.0
    %764 = vmatpush2.msra.mxu0 0.0
    %765 = vmatprep.subr.mxu0 0.0
    %766 = vmatpush2.msra.mxu0 0.0
    %767 = vmatprep.subr.mxu0 0.0
    %768 = vmatpush2.msra.mxu0 0.0
    %769 = vmatprep.subr.mxu0 0.0
    %770 = vmatpush2.msra.mxu0 0.0
    %771 = vmatprep.subr.mxu0 0.0
    %772 = vmatpush2.msra.mxu0 0.0
    %773 = vmatprep.subr.mxu0 0.0
    %774 = vmatpush2.msra.mxu0 0.0
    %775 = vmatprep.subr.mxu0 0.0
    %776 = vmatpush2.msra.mxu0 0.0
    %777 = vmatprep.subr.mxu0 0.0
    %778 = vmatpush2.msra.mxu0 0.0
    %779 = vmatprep.subr.mxu0 0.0
    %780 = vmatpush2.msra.mxu0 0.0
    %781 = vmatprep.subr.mxu0 0.0
    %782 = vmatpush2.msra.mxu0 0.0
    %783 = vmatprep.subr.mxu0 0.0
    %784 = vmatpush2.msra.mxu0 0.0
    %785 = vmatprep.subr.mxu0 0.0
    %786 = vmatpush2.msra.mxu0 0.0
    %787 = vmatprep.mubr.f32.mxu0 0.0
    %788 = vmatmul.mubr.f32.gmra.mxu0 %v651
    %v789 = vpop.f32.mrf.mxu0
    %v790 = vadd.f32 0.0, %v789
    %v791 = vpop.f32.mrf.mxu0
    %v792 = vadd.f32 0.0, %v791
    %793 = vdwg.mxu0
    %v798 = vrot.slane %v719, 6
    %v799 = vrot.slane %v721, 6
    %v800 = vrot.slane %v790, 6
    %v801 = vrot.slane %v792, 6
    %v806 = vadd.f32 %v299, %v798
    %v807 = vadd.f32 %v301, %v799
    %v808 = vadd.f32 %v376, %v800
    %v809 = vadd.f32 %v378, %v801
    %v810 = vxor.u32 %v806, 2147483648
    %v811 = vmul.f32 %v810, 1.442695
    %v812 = vpow.pop %v811
    %v813 = vadd.f32 %v812, 1.0
    %v814 = vrcp.pop %v813
    %v815 = vmul.f32 1.0, %v814
    %v816 = vxor.u32 %v807, 2147483648
    %v817 = vmul.f32 %v816, 1.442695
    %v818 = vpow.pop %v817
    %v819 = vadd.f32 %v818, 1.0
    %v820 = vrcp.pop %v819
    %v821 = vmul.f32 1.0, %v820
    %v822 = vtanh.pop %v808
    %v823 = vxor.u32 %v809, 2147483648
    %v824 = vmul.f32 %v823, 1.442695
    %v825 = vpow.pop %v824
    %v826 = vadd.f32 %v825, 1.0
    %v827 = vrcp.pop %v826
    %v828 = vmul.f32 1.0, %v827
    %v830 = vrot.slane %v649, 6
    %v832 = vmul.f32 %v821, %v830
    %v833 = vmul.f32 %v815, %v822
    %v834 = vadd.f32 %v832, %v833
    %v835 = vtanh.pop %v834
    %v836 = vmul.f32 %v828, %v835
    %v838 = vrot.slane %v836, 2
    %840 = vmatprep.subr.mxu0 %v479
    %841 = vmatpush1.msra.mxu0 %v478
    %842 = vmatprep.subr.mxu0 %v475
    %843 = vmatpush1.msra.mxu0 %v474
    %844 = vmatprep.subr.mxu0 %v471
    %845 = vmatpush1.msra.mxu0 %v470
    %846 = vmatprep.subr.mxu0 %v467
    %847 = vmatpush1.msra.mxu0 %v466
    %848 = vmatprep.subr.mxu0 %v463
    %849 = vmatpush1.msra.mxu0 %v462
    %850 = vmatprep.subr.mxu0 %v459
    %851 = vmatpush1.msra.mxu0 %v458
    %852 = vmatprep.subr.mxu0 %v455
    %853 = vmatpush1.msra.mxu0 %v454
    %854 = vmatprep.subr.mxu0 %v451
    %855 = vmatpush1.msra.mxu0 %v450
    %856 = vmatprep.subr.mxu0 %v447
    %857 = vmatpush1.msra.mxu0 %v446
    %858 = vmatprep.subr.mxu0 %v443
    %859 = vmatpush1.msra.mxu0 %v442
    %860 = vmatprep.subr.mxu0 %v439
    %861 = vmatpush1.msra.mxu0 %v438
    %862 = vmatprep.subr.mxu0 %v435
    %863 = vmatpush1.msra.mxu0 %v434
    %864 = vmatprep.subr.mxu0 %v431
    %865 = vmatpush1.msra.mxu0 %v430
    %866 = vmatprep.subr.mxu0 %v427
    %867 = vmatpush1.msra.mxu0 %v426
    %868 = vmatprep.subr.mxu0 %v423
    %869 = vmatpush1.msra.mxu0 %v422
    %870 = vmatprep.subr.mxu0 %v419
    %871 = vmatpush1.msra.mxu0 %v418
    %872 = vmatprep.subr.mxu0 0.0
    %873 = vmatpush2.msra.mxu0 0.0
    %874 = vmatprep.subr.mxu0 0.0
    %875 = vmatpush2.msra.mxu0 0.0
    %876 = vmatprep.subr.mxu0 0.0
    %877 = vmatpush2.msra.mxu0 0.0
    %878 = vmatprep.subr.mxu0 0.0
    %879 = vmatpush2.msra.mxu0 0.0
    %880 = vmatprep.subr.mxu0 0.0
    %881 = vmatpush2.msra.mxu0 0.0
    %882 = vmatprep.subr.mxu0 0.0
    %883 = vmatpush2.msra.mxu0 0.0
    %884 = vmatprep.subr.mxu0 0.0
    %885 = vmatpush2.msra.mxu0 0.0
    %886 = vmatprep.subr.mxu0 0.0
    %887 = vmatpush2.msra.mxu0 0.0
    %888 = vmatprep.subr.mxu0 0.0
    %889 = vmatpush2.msra.mxu0 0.0
    %890 = vmatprep.subr.mxu0 0.0
    %891 = vmatpush2.msra.mxu0 0.0
    %892 = vmatprep.subr.mxu0 0.0
    %893 = vmatpush2.msra.mxu0 0.0
    %894 = vmatprep.subr.mxu0 0.0
    %895 = vmatpush2.msra.mxu0 0.0
    %896 = vmatprep.subr.mxu0 0.0
    %897 = vmatpush2.msra.mxu0 0.0
    %898 = vmatprep.subr.mxu0 0.0
    %899 = vmatpush2.msra.mxu0 0.0
    %900 = vmatprep.subr.mxu0 0.0
    %901 = vmatpush2.msra.mxu0 0.0
    %902 = vmatprep.subr.mxu0 0.0
    %903 = vmatpush2.msra.mxu0 0.0
    %904 = vmatprep.mubr.f32.mxu0 0.0
    %905 = vmatmul.mubr.f32.gmra.mxu0 %v838
    %v906 = vpop.f32.mrf.mxu0
    %v907 = vadd.f32 0.0, %v906
    %v908 = vpop.f32.mrf.mxu0
    %v909 = vadd.f32 0.0, %v908
    %910 = vdwg.mxu0
    %911 = vmatprep.subr.mxu0 %v481
    %912 = vmatpush1.msra.mxu0 %v480
    %913 = vmatprep.subr.mxu0 %v477
    %914 = vmatpush1.msra.mxu0 %v476
    %915 = vmatprep.subr.mxu0 %v473
    %916 = vmatpush1.msra.mxu0 %v472
    %917 = vmatprep.subr.mxu0 %v469
    %918 = vmatpush1.msra.mxu0 %v468
    %919 = vmatprep.subr.mxu0 %v465
    %920 = vmatpush1.msra.mxu0 %v464
    %921 = vmatprep.subr.mxu0 %v461
    %922 = vmatpush1.msra.mxu0 %v460
    %923 = vmatprep.subr.mxu0 %v457
    %924 = vmatpush1.msra.mxu0 %v456
    %925 = vmatprep.subr.mxu0 %v453
    %926 = vmatpush1.msra.mxu0 %v452
    %927 = vmatprep.subr.mxu0 %v449
    %928 = vmatpush1.msra.mxu0 %v448
    %929 = vmatprep.subr.mxu0 %v445
    %930 = vmatpush1.msra.mxu0 %v444
    %931 = vmatprep.subr.mxu0 %v441
    %932 = vmatpush1.msra.mxu0 %v440
    %933 = vmatprep.subr.mxu0 %v437
    %934 = vmatpush1.msra.mxu0 %v436
    %935 = vmatprep.subr.mxu0 %v433
    %936 = vmatpush1.msra.mxu0 %v432
    %937 = vmatprep.subr.mxu0 %v429
    %938 = vmatpush1.msra.mxu0 %v428
    %939 = vmatprep.subr.mxu0 %v425
    %940 = vmatpush1.msra.mxu0 %v424
    %941 = vmatprep.subr.mxu0 %v421
    %942 = vmatpush1.msra.mxu0 %v420
    %943 = vmatprep.subr.mxu0 0.0
    %944 = vmatpush2.msra.mxu0 0.0
    %945 = vmatprep.subr.mxu0 0.0
    %946 = vmatpush2.msra.mxu0 0.0
    %947 = vmatprep.subr.mxu0 0.0
    %948 = vmatpush2.msra.mxu0 0.0
    %949 = vmatprep.subr.mxu0 0.0
    %950 = vmatpush2.msra.mxu0 0.0
    %951 = vmatprep.subr.mxu0 0.0
    %952 = vmatpush2.msra.mxu0 0.0
    %953 = vmatprep.subr.mxu0 0.0
    %954 = vmatpush2.msra.mxu0 0.0
    %955 = vmatprep.subr.mxu0 0.0
    %956 = vmatpush2.msra.mxu0 0.0
    %957 = vmatprep.subr.mxu0 0.0
    %958 = vmatpush2.msra.mxu0 0.0
    %959 = vmatprep.subr.mxu0 0.0
    %960 = vmatpush2.msra.mxu0 0.0
    %961 = vmatprep.subr.mxu0 0.0
    %962 = vmatpush2.msra.mxu0 0.0
    %963 = vmatprep.subr.mxu0 0.0
    %964 = vmatpush2.msra.mxu0 0.0
    %965 = vmatprep.subr.mxu0 0.0
    %966 = vmatpush2.msra.mxu0 0.0
    %967 = vmatprep.subr.mxu0 0.0
    %968 = vmatpush2.msra.mxu0 0.0
    %969 = vmatprep.subr.mxu0 0.0
    %970 = vmatpush2.msra.mxu0 0.0
    %971 = vmatprep.subr.mxu0 0.0
    %972 = vmatpush2.msra.mxu0 0.0
    %973 = vmatprep.subr.mxu0 0.0
    %974 = vmatpush2.msra.mxu0 0.0
    %975 = vmatprep.mubr.f32.mxu0 0.0
    %976 = vmatmul.mubr.f32.gmra.mxu0 %v838
    %v977 = vpop.f32.mrf.mxu0
    %v978 = vadd.f32 0.0, %v977
    %v979 = vpop.f32.mrf.mxu0
    %v980 = vadd.f32 0.0, %v979
    %981 = vdwg.mxu0
    %v986 = vrot.slane %v907, 4
    %v987 = vrot.slane %v909, 4
    %v988 = vrot.slane %v978, 4
    %v989 = vrot.slane %v980, 4
    %v994 = vadd.f32 %v299, %v986
    %v995 = vadd.f32 %v301, %v987
    %v996 = vadd.f32 %v376, %v988
    %v997 = vadd.f32 %v378, %v989
    %v998 = vxor.u32 %v994, 2147483648
    %v999 = vmul.f32 %v998, 1.442695
    %v1000 = vpow.pop %v999
    %v1001 = vadd.f32 %v1000, 1.0
    %v1002 = vrcp.pop %v1001
    %v1003 = vmul.f32 1.0, %v1002
    %v1004 = vxor.u32 %v995, 2147483648
    %v1005 = vmul.f32 %v1004, 1.442695
    %v1006 = vpow.pop %v1005
    %v1007 = vadd.f32 %v1006, 1.0
    %v1008 = vrcp.pop %v1007
    %v1009 = vmul.f32 1.0, %v1008
    %v1010 = vtanh.pop %v996
    %v1011 = vxor.u32 %v997, 2147483648
    %v1012 = vmul.f32 %v1011, 1.442695
    %v1013 = vpow.pop %v1012
    %v1014 = vadd.f32 %v1013, 1.0
    %v1015 = vrcp.pop %v1014
    %v1016 = vmul.f32 1.0, %v1015
    %v1018 = vrot.slane %v834, 6
    %v1020 = vmul.f32 %v1009, %v1018
    %v1021 = vmul.f32 %v1003, %v1010
    %v1022 = vadd.f32 %v1020, %v1021
    %v1023 = vtanh.pop %v1022
    %v1024 = vmul.f32 %v1016, %v1023
    %v1026 = vrot.slane %v1024, 4
    %1028 = vmatprep.subr.mxu0 %v479
    %1029 = vmatpush1.msra.mxu0 %v478
    %1030 = vmatprep.subr.mxu0 %v475
    %1031 = vmatpush1.msra.mxu0 %v474
    %1032 = vmatprep.subr.mxu0 %v471
    %1033 = vmatpush1.msra.mxu0 %v470
    %1034 = vmatprep.subr.mxu0 %v467
    %1035 = vmatpush1.msra.mxu0 %v466
    %1036 = vmatprep.subr.mxu0 %v463
    %1037 = vmatpush1.msra.mxu0 %v462
    %1038 = vmatprep.subr.mxu0 %v459
    %1039 = vmatpush1.msra.mxu0 %v458
    %1040 = vmatprep.subr.mxu0 %v455
    %1041 = vmatpush1.msra.mxu0 %v454
    %1042 = vmatprep.subr.mxu0 %v451
    %1043 = vmatpush1.msra.mxu0 %v450
    %1044 = vmatprep.subr.mxu0 %v447
    %1045 = vmatpush1.msra.mxu0 %v446
    %1046 = vmatprep.subr.mxu0 %v443
    %1047 = vmatpush1.msra.mxu0 %v442
    %1048 = vmatprep.subr.mxu0 %v439
    %1049 = vmatpush1.msra.mxu0 %v438
    %1050 = vmatprep.subr.mxu0 %v435
    %1051 = vmatpush1.msra.mxu0 %v434
    %1052 = vmatprep.subr.mxu0 %v431
    %1053 = vmatpush1.msra.mxu0 %v430
    %1054 = vmatprep.subr.mxu0 %v427
    %1055 = vmatpush1.msra.mxu0 %v426
    %1056 = vmatprep.subr.mxu0 %v423
    %1057 = vmatpush1.msra.mxu0 %v422
    %1058 = vmatprep.subr.mxu0 %v419
    %1059 = vmatpush1.msra.mxu0 %v418
    %1060 = vmatprep.subr.mxu0 0.0
    %1061 = vmatpush2.msra.mxu0 0.0
    %1062 = vmatprep.subr.mxu0 0.0
    %1063 = vmatpush2.msra.mxu0 0.0
    %1064 = vmatprep.subr.mxu0 0.0
    %1065 = vmatpush2.msra.mxu0 0.0
    %1066 = vmatprep.subr.mxu0 0.0
    %1067 = vmatpush2.msra.mxu0 0.0
    %1068 = vmatprep.subr.mxu0 0.0
    %1069 = vmatpush2.msra.mxu0 0.0
    %1070 = vmatprep.subr.mxu0 0.0
    %1071 = vmatpush2.msra.mxu0 0.0
    %1072 = vmatprep.subr.mxu0 0.0
    %1073 = vmatpush2.msra.mxu0 0.0
    %1074 = vmatprep.subr.mxu0 0.0
    %1075 = vmatpush2.msra.mxu0 0.0
    %1076 = vmatprep.subr.mxu0 0.0
    %1077 = vmatpush2.msra.mxu0 0.0
    %1078 = vmatprep.subr.mxu0 0.0
    %1079 = vmatpush2.msra.mxu0 0.0
    %1080 = vmatprep.subr.mxu0 0.0
    %1081 = vmatpush2.msra.mxu0 0.0
    %1082 = vmatprep.subr.mxu0 0.0
    %1083 = vmatpush2.msra.mxu0 0.0
    %1084 = vmatprep.subr.mxu0 0.0
    %1085 = vmatpush2.msra.mxu0 0.0
    %1086 = vmatprep.subr.mxu0 0.0
    %1087 = vmatpush2.msra.mxu0 0.0
    %1088 = vmatprep.subr.mxu0 0.0
    %1089 = vmatpush2.msra.mxu0 0.0
    %1090 = vmatprep.subr.mxu0 0.0
    %1091 = vmatpush2.msra.mxu0 0.0
    %1092 = vmatprep.mubr.f32.mxu0 0.0
    %1093 = vmatmul.mubr.f32.gmra.mxu0 %v1026
    %v1094 = vpop.f32.mrf.mxu0
    %v1095 = vadd.f32 0.0, %v1094
    %v1096 = vpop.f32.mrf.mxu0
    %v1097 = vadd.f32 0.0, %v1096
    %1098 = vdwg.mxu0
    %1099 = vmatprep.subr.mxu0 %v481
    %1100 = vmatpush1.msra.mxu0 %v480
    %1101 = vmatprep.subr.mxu0 %v477
    %1102 = vmatpush1.msra.mxu0 %v476
    %1103 = vmatprep.subr.mxu0 %v473
    %1104 = vmatpush1.msra.mxu0 %v472
    %1105 = vmatprep.subr.mxu0 %v469
    %1106 = vmatpush1.msra.mxu0 %v468
    %1107 = vmatprep.subr.mxu0 %v465
    %1108 = vmatpush1.msra.mxu0 %v464
    %1109 = vmatprep.subr.mxu0 %v461
    %1110 = vmatpush1.msra.mxu0 %v460
    %1111 = vmatprep.subr.mxu0 %v457
    %1112 = vmatpush1.msra.mxu0 %v456
    %1113 = vmatprep.subr.mxu0 %v453
    %1114 = vmatpush1.msra.mxu0 %v452
    %1115 = vmatprep.subr.mxu0 %v449
    %1116 = vmatpush1.msra.mxu0 %v448
    %1117 = vmatprep.subr.mxu0 %v445
    %1118 = vmatpush1.msra.mxu0 %v444
    %1119 = vmatprep.subr.mxu0 %v441
    %1120 = vmatpush1.msra.mxu0 %v440
    %1121 = vmatprep.subr.mxu0 %v437
    %1122 = vmatpush1.msra.mxu0 %v436
    %1123 = vmatprep.subr.mxu0 %v433
    %1124 = vmatpush1.msra.mxu0 %v432
    %1125 = vmatprep.subr.mxu0 %v429
    %1126 = vmatpush1.msra.mxu0 %v428
    %1127 = vmatprep.subr.mxu0 %v425
    %1128 = vmatpush1.msra.mxu0 %v424
    %1129 = vmatprep.subr.mxu0 %v421
    %1130 = vmatpush1.msra.mxu0 %v420
    %1131 = vmatprep.subr.mxu0 0.0
    %1132 = vmatpush2.msra.mxu0 0.0
    %1133 = vmatprep.subr.mxu0 0.0
    %1134 = vmatpush2.msra.mxu0 0.0
    %1135 = vmatprep.subr.mxu0 0.0
    %1136 = vmatpush2.msra.mxu0 0.0
    %1137 = vmatprep.subr.mxu0 0.0
    %1138 = vmatpush2.msra.mxu0 0.0
    %1139 = vmatprep.subr.mxu0 0.0
    %1140 = vmatpush2.msra.mxu0 0.0
    %1141 = vmatprep.subr.mxu0 0.0
    %1142 = vmatpush2.msra.mxu0 0.0
    %1143 = vmatprep.subr.mxu0 0.0
    %1144 = vmatpush2.msra.mxu0 0.0
    %1145 = vmatprep.subr.mxu0 0.0
    %1146 = vmatpush2.msra.mxu0 0.0
    %1147 = vmatprep.subr.mxu0 0.0
    %1148 = vmatpush2.msra.mxu0 0.0
    %1149 = vmatprep.subr.mxu0 0.0
    %1150 = vmatpush2.msra.mxu0 0.0
    %1151 = vmatprep.subr.mxu0 0.0
    %1152 = vmatpush2.msra.mxu0 0.0
    %1153 = vmatprep.subr.mxu0 0.0
    %1154 = vmatpush2.msra.mxu0 0.0
    %1155 = vmatprep.subr.mxu0 0.0
    %1156 = vmatpush2.msra.mxu0 0.0
    %1157 = vmatprep.subr.mxu0 0.0
    %1158 = vmatpush2.msra.mxu0 0.0
    %1159 = vmatprep.subr.mxu0 0.0
    %1160 = vmatpush2.msra.mxu0 0.0
    %1161 = vmatprep.subr.mxu0 0.0
    %1162 = vmatpush2.msra.mxu0 0.0
    %1163 = vmatprep.mubr.f32.mxu0 0.0
    %1164 = vmatmul.mubr.f32.gmra.mxu0 %v1026
    %v1165 = vpop.f32.mrf.mxu0
    %v1166 = vadd.f32 0.0, %v1165
    %v1167 = vpop.f32.mrf.mxu0
    %v1168 = vadd.f32 0.0, %v1167
    %1169 = vdwg.mxu0
    %v1174 = vrot.slane %v1095, 2
    %v1175 = vrot.slane %v1097, 2
    %v1176 = vrot.slane %v1166, 2
    %v1177 = vrot.slane %v1168, 2
    %v1182 = vadd.f32 %v299, %v1174
    %v1183 = vadd.f32 %v301, %v1175
    %v1184 = vadd.f32 %v376, %v1176
    %v1185 = vadd.f32 %v378, %v1177
    %v1186 = vxor.u32 %v1182, 2147483648
    %v1187 = vmul.f32 %v1186, 1.442695
    %v1188 = vpow.pop %v1187
    %v1189 = vadd.f32 %v1188, 1.0
    %v1190 = vrcp.pop %v1189
    %v1191 = vmul.f32 1.0, %v1190
    %v1192 = vxor.u32 %v1183, 2147483648
    %v1193 = vmul.f32 %v1192, 1.442695
    %v1194 = vpow.pop %v1193
    %v1195 = vadd.f32 %v1194, 1.0
    %v1196 = vrcp.pop %v1195
    %v1197 = vmul.f32 1.0, %v1196
    %v1198 = vtanh.pop %v1184
    %v1199 = vxor.u32 %v1185, 2147483648
    %v1200 = vmul.f32 %v1199, 1.442695
    %v1201 = vpow.pop %v1200
    %v1202 = vadd.f32 %v1201, 1.0
    %v1203 = vrcp.pop %v1202
    %v1204 = vmul.f32 1.0, %v1203
    %v1206 = vrot.slane %v1022, 6
    %v1208 = vmul.f32 %v1197, %v1206
    %v1209 = vmul.f32 %v1191, %v1198
    %v1210 = vadd.f32 %v1208, %v1209
    %v1211 = vtanh.pop %v1210
    %v1212 = vmul.f32 %v1204, %v1211
    %v1214 = vrot.slane %v1212, 6
    %1216 = vmatprep.subr.mxu0 %v479
    %1217 = vmatpush1.msra.mxu0 %v478
    %1218 = vmatprep.subr.mxu0 %v475
    %1219 = vmatpush1.msra.mxu0 %v474
    %1220 = vmatprep.subr.mxu0 %v471
    %1221 = vmatpush1.msra.mxu0 %v470
    %1222 = vmatprep.subr.mxu0 %v467
    %1223 = vmatpush1.msra.mxu0 %v466
    %1224 = vmatprep.subr.mxu0 %v463
    %1225 = vmatpush1.msra.mxu0 %v462
    %1226 = vmatprep.subr.mxu0 %v459
    %1227 = vmatpush1.msra.mxu0 %v458
    %1228 = vmatprep.subr.mxu0 %v455
    %1229 = vmatpush1.msra.mxu0 %v454
    %1230 = vmatprep.subr.mxu0 %v451
    %1231 = vmatpush1.msra.mxu0 %v450
    %1232 = vmatprep.subr.mxu0 %v447
    %1233 = vmatpush1.msra.mxu0 %v446
    %1234 = vmatprep.subr.mxu0 %v443
    %1235 = vmatpush1.msra.mxu0 %v442
    %1236 = vmatprep.subr.mxu0 %v439
    %1237 = vmatpush1.msra.mxu0 %v438
    %1238 = vmatprep.subr.mxu0 %v435
    %1239 = vmatpush1.msra.mxu0 %v434
    %1240 = vmatprep.subr.mxu0 %v431
    %1241 = vmatpush1.msra.mxu0 %v430
    %1242 = vmatprep.subr.mxu0 %v427
    %1243 = vmatpush1.msra.mxu0 %v426
    %1244 = vmatprep.subr.mxu0 %v423
    %1245 = vmatpush1.msra.mxu0 %v422
    %1246 = vmatprep.subr.mxu0 %v419
    %1247 = vmatpush1.msra.mxu0 %v418
    %1248 = vmatprep.subr.mxu0 0.0
    %1249 = vmatpush2.msra.mxu0 0.0
    %1250 = vmatprep.subr.mxu0 0.0
    %1251 = vmatpush2.msra.mxu0 0.0
    %1252 = vmatprep.subr.mxu0 0.0
    %1253 = vmatpush2.msra.mxu0 0.0
    %1254 = vmatprep.subr.mxu0 0.0
    %1255 = vmatpush2.msra.mxu0 0.0
    %1256 = vmatprep.subr.mxu0 0.0
    %1257 = vmatpush2.msra.mxu0 0.0
    %1258 = vmatprep.subr.mxu0 0.0
    %1259 = vmatpush2.msra.mxu0 0.0
    %1260 = vmatprep.subr.mxu0 0.0
    %1261 = vmatpush2.msra.mxu0 0.0
    %1262 = vmatprep.subr.mxu0 0.0
    %1263 = vmatpush2.msra.mxu0 0.0
    %1264 = vmatprep.subr.mxu0 0.0
    %1265 = vmatpush2.msra.mxu0 0.0
    %1266 = vmatprep.subr.mxu0 0.0
    %1267 = vmatpush2.msra.mxu0 0.0
    %1268 = vmatprep.subr.mxu0 0.0
    %1269 = vmatpush2.msra.mxu0 0.0
    %1270 = vmatprep.subr.mxu0 0.0
    %1271 = vmatpush2.msra.mxu0 0.0
    %1272 = vmatprep.subr.mxu0 0.0
    %1273 = vmatpush2.msra.mxu0 0.0
    %1274 = vmatprep.subr.mxu0 0.0
    %1275 = vmatpush2.msra.mxu0 0.0
    %1276 = vmatprep.subr.mxu0 0.0
    %1277 = vmatpush2.msra.mxu0 0.0
    %1278 = vmatprep.subr.mxu0 0.0
    %1279 = vmatpush2.msra.mxu0 0.0
    %1280 = vmatprep.mubr.f32.mxu0 0.0
    %1281 = vmatmul.mubr.f32.gmra.mxu0 %v1214
    %v1282 = vpop.f32.mrf.mxu0
    %v1283 = vadd.f32 0.0, %v1282
    %v1284 = vpop.f32.mrf.mxu0
    %v1285 = vadd.f32 0.0, %v1284
    %1286 = vdwg.mxu0
    %1287 = vmatprep.subr.mxu0 %v481
    %1288 = vmatpush1.msra.mxu0 %v480
    %1289 = vmatprep.subr.mxu0 %v477
    %1290 = vmatpush1.msra.mxu0 %v476
    %1291 = vmatprep.subr.mxu0 %v473
    %1292 = vmatpush1.msra.mxu0 %v472
    %1293 = vmatprep.subr.mxu0 %v469
    %1294 = vmatpush1.msra.mxu0 %v468
    %1295 = vmatprep.subr.mxu0 %v465
    %1296 = vmatpush1.msra.mxu0 %v464
    %1297 = vmatprep.subr.mxu0 %v461
    %1298 = vmatpush1.msra.mxu0 %v460
    %1299 = vmatprep.subr.mxu0 %v457
    %1300 = vmatpush1.msra.mxu0 %v456
    %1301 = vmatprep.subr.mxu0 %v453
    %1302 = vmatpush1.msra.mxu0 %v452
    %1303 = vmatprep.subr.mxu0 %v449
    %1304 = vmatpush1.msra.mxu0 %v448
    %1305 = vmatprep.subr.mxu0 %v445
    %1306 = vmatpush1.msra.mxu0 %v444
    %1307 = vmatprep.subr.mxu0 %v441
    %1308 = vmatpush1.msra.mxu0 %v440
    %1309 = vmatprep.subr.mxu0 %v437
    %1310 = vmatpush1.msra.mxu0 %v436
    %1311 = vmatprep.subr.mxu0 %v433
    %1312 = vmatpush1.msra.mxu0 %v432
    %1313 = vmatprep.subr.mxu0 %v429
    %1314 = vmatpush1.msra.mxu0 %v428
    %1315 = vmatprep.subr.mxu0 %v425
    %1316 = vmatpush1.msra.mxu0 %v424
    %1317 = vmatprep.subr.mxu0 %v421
    %1318 = vmatpush1.msra.mxu0 %v420
    %1319 = vmatprep.subr.mxu0 0.0
    %1320 = vmatpush2.msra.mxu0 0.0
    %1321 = vmatprep.subr.mxu0 0.0
    %1322 = vmatpush2.msra.mxu0 0.0
    %1323 = vmatprep.subr.mxu0 0.0
    %1324 = vmatpush2.msra.mxu0 0.0
    %1325 = vmatprep.subr.mxu0 0.0
    %1326 = vmatpush2.msra.mxu0 0.0
    %1327 = vmatprep.subr.mxu0 0.0
    %1328 = vmatpush2.msra.mxu0 0.0
    %1329 = vmatprep.subr.mxu0 0.0
    %1330 = vmatpush2.msra.mxu0 0.0
    %1331 = vmatprep.subr.mxu0 0.0
    %1332 = vmatpush2.msra.mxu0 0.0
    %1333 = vmatprep.subr.mxu0 0.0
    %1334 = vmatpush2.msra.mxu0 0.0
    %1335 = vmatprep.subr.mxu0 0.0
    %1336 = vmatpush2.msra.mxu0 0.0
    %1337 = vmatprep.subr.mxu0 0.0
    %1338 = vmatpush2.msra.mxu0 0.0
    %1339 = vmatprep.subr.mxu0 0.0
    %1340 = vmatpush2.msra.mxu0 0.0
    %1341 = vmatprep.subr.mxu0 0.0
    %1342 = vmatpush2.msra.mxu0 0.0
    %1343 = vmatprep.subr.mxu0 0.0
    %1344 = vmatpush2.msra.mxu0 0.0
    %1345 = vmatprep.subr.mxu0 0.0
    %1346 = vmatpush2.msra.mxu0 0.0
    %1347 = vmatprep.subr.mxu0 0.0
    %1348 = vmatpush2.msra.mxu0 0.0
    %1349 = vmatprep.subr.mxu0 0.0
    %1350 = vmatpush2.msra.mxu0 0.0
    %1351 = vmatprep.mubr.f32.mxu0 0.0
    %1352 = vmatmul.mubr.f32.gmra.mxu0 %v1214
    %v1353 = vpop.f32.mrf.mxu0
    %v1354 = vadd.f32 0.0, %v1353
    %v1355 = vpop.f32.mrf.mxu0
    %v1356 = vadd.f32 0.0, %v1355
    %1357 = vdwg.mxu0
    %v1358 = vadd.f32 %v305, %v1283
    %v1359 = vadd.f32 %v307, %v1285
    %v1360 = vadd.f32 %v382, %v1354
    %v1361 = vadd.f32 %v384, %v1356
    %v1362 = vxor.u32 %v1358, 2147483648
    %v1363 = vmul.f32 %v1362, 1.442695
    %v1364 = vpow.pop %v1363
    %v1365 = vadd.f32 %v1364, 1.0
    %v1366 = vrcp.pop %v1365
    %v1367 = vmul.f32 1.0, %v1366
    %v1368 = vxor.u32 %v1359, 2147483648
    %v1369 = vmul.f32 %v1368, 1.442695
    %v1370 = vpow.pop %v1369
    %v1371 = vadd.f32 %v1370, 1.0
    %v1372 = vrcp.pop %v1371
    %v1373 = vmul.f32 1.0, %v1372
    %v1374 = vtanh.pop %v1360
    %v1375 = vxor.u32 %v1361, 2147483648
    %v1376 = vmul.f32 %v1375, 1.442695
    %v1377 = vpow.pop %v1376
    %v1378 = vadd.f32 %v1377, 1.0
    %v1379 = vrcp.pop %v1378
    %v1380 = vmul.f32 1.0, %v1379
    %v1382 = vrot.slane %v1210, 6
    %v1384 = vmul.f32 %v1373, %v1382
    %v1385 = vmul.f32 %v1367, %v1374
    %v1386 = vadd.f32 %v1384, %v1385
    %v1387 = vtanh.pop %v1386
    %v1388 = vmul.f32 %v1380, %v1387
    %1389 = vmatprep.subr.mxu0 %v479
    %1390 = vmatpush1.msra.mxu0 %v478
    %1391 = vmatprep.subr.mxu0 %v475
    %1392 = vmatpush1.msra.mxu0 %v474
    %1393 = vmatprep.subr.mxu0 %v471
    %1394 = vmatpush1.msra.mxu0 %v470
    %1395 = vmatprep.subr.mxu0 %v467
    %1396 = vmatpush1.msra.mxu0 %v466
    %1397 = vmatprep.subr.mxu0 %v463
    %1398 = vmatpush1.msra.mxu0 %v462
    %1399 = vmatprep.subr.mxu0 %v459
    %1400 = vmatpush1.msra.mxu0 %v458
    %1401 = vmatprep.subr.mxu0 %v455
    %1402 = vmatpush1.msra.mxu0 %v454
    %1403 = vmatprep.subr.mxu0 %v451
    %1404 = vmatpush1.msra.mxu0 %v450
    %1405 = vmatprep.subr.mxu0 %v447
    %1406 = vmatpush1.msra.mxu0 %v446
    %1407 = vmatprep.subr.mxu0 %v443
    %1408 = vmatpush1.msra.mxu0 %v442
    %1409 = vmatprep.subr.mxu0 %v439
    %1410 = vmatpush1.msra.mxu0 %v438
    %1411 = vmatprep.subr.mxu0 %v435
    %1412 = vmatpush1.msra.mxu0 %v434
    %1413 = vmatprep.subr.mxu0 %v431
    %1414 = vmatpush1.msra.mxu0 %v430
    %1415 = vmatprep.subr.mxu0 %v427
    %1416 = vmatpush1.msra.mxu0 %v426
    %1417 = vmatprep.subr.mxu0 %v423
    %1418 = vmatpush1.msra.mxu0 %v422
    %1419 = vmatprep.subr.mxu0 %v419
    %1420 = vmatpush1.msra.mxu0 %v418
    %1421 = vmatprep.subr.mxu0 0.0
    %1422 = vmatpush2.msra.mxu0 0.0
    %1423 = vmatprep.subr.mxu0 0.0
    %1424 = vmatpush2.msra.mxu0 0.0
    %1425 = vmatprep.subr.mxu0 0.0
    %1426 = vmatpush2.msra.mxu0 0.0
    %1427 = vmatprep.subr.mxu0 0.0
    %1428 = vmatpush2.msra.mxu0 0.0
    %1429 = vmatprep.subr.mxu0 0.0
    %1430 = vmatpush2.msra.mxu0 0.0
    %1431 = vmatprep.subr.mxu0 0.0
    %1432 = vmatpush2.msra.mxu0 0.0
    %1433 = vmatprep.subr.mxu0 0.0
    %1434 = vmatpush2.msra.mxu0 0.0
    %1435 = vmatprep.subr.mxu0 0.0
    %1436 = vmatpush2.msra.mxu0 0.0
    %1437 = vmatprep.subr.mxu0 0.0
    %1438 = vmatpush2.msra.mxu0 0.0
    %1439 = vmatprep.subr.mxu0 0.0
    %1440 = vmatpush2.msra.mxu0 0.0
    %1441 = vmatprep.subr.mxu0 0.0
    %1442 = vmatpush2.msra.mxu0 0.0
    %1443 = vmatprep.subr.mxu0 0.0
    %1444 = vmatpush2.msra.mxu0 0.0
    %1445 = vmatprep.subr.mxu0 0.0
    %1446 = vmatpush2.msra.mxu0 0.0
    %1447 = vmatprep.subr.mxu0 0.0
    %1448 = vmatpush2.msra.mxu0 0.0
    %1449 = vmatprep.subr.mxu0 0.0
    %1450 = vmatpush2.msra.mxu0 0.0
    %1451 = vmatprep.subr.mxu0 0.0
    %1452 = vmatpush2.msra.mxu0 0.0
    %1453 = vmatprep.mubr.f32.mxu0 0.0
    %1454 = vmatmul.mubr.f32.gmra.mxu0 %v1388
    %v1455 = vpop.f32.mrf.mxu0
    %v1456 = vadd.f32 0.0, %v1455
    %v1457 = vpop.f32.mrf.mxu0
    %v1458 = vadd.f32 0.0, %v1457
    %1459 = vdwg.mxu0
    %1460 = vmatprep.subr.mxu0 %v481
    %1461 = vmatpush1.msra.mxu0 %v480
    %1462 = vmatprep.subr.mxu0 %v477
    %1463 = vmatpush1.msra.mxu0 %v476
    %1464 = vmatprep.subr.mxu0 %v473
    %1465 = vmatpush1.msra.mxu0 %v472
    %1466 = vmatprep.subr.mxu0 %v469
    %1467 = vmatpush1.msra.mxu0 %v468
    %1468 = vmatprep.subr.mxu0 %v465
    %1469 = vmatpush1.msra.mxu0 %v464
    %1470 = vmatprep.subr.mxu0 %v461
    %1471 = vmatpush1.msra.mxu0 %v460
    %1472 = vmatprep.subr.mxu0 %v457
    %1473 = vmatpush1.msra.mxu0 %v456
    %1474 = vmatprep.subr.mxu0 %v453
    %1475 = vmatpush1.msra.mxu0 %v452
    %1476 = vmatprep.subr.mxu0 %v449
    %1477 = vmatpush1.msra.mxu0 %v448
    %1478 = vmatprep.subr.mxu0 %v445
    %1479 = vmatpush1.msra.mxu0 %v444
    %1480 = vmatprep.subr.mxu0 %v441
    %1481 = vmatpush1.msra.mxu0 %v440
    %1482 = vmatprep.subr.mxu0 %v437
    %1483 = vmatpush1.msra.mxu0 %v436
    %1484 = vmatprep.subr.mxu0 %v433
    %1485 = vmatpush1.msra.mxu0 %v432
    %1486 = vmatprep.subr.mxu0 %v429
    %1487 = vmatpush1.msra.mxu0 %v428
    %1488 = vmatprep.subr.mxu0 %v425
    %1489 = vmatpush1.msra.mxu0 %v424
    %1490 = vmatprep.subr.mxu0 %v421
    %1491 = vmatpush1.msra.mxu0 %v420
    %1492 = vmatprep.subr.mxu0 0.0
    %1493 = vmatpush2.msra.mxu0 0.0
    %1494 = vmatprep.subr.mxu0 0.0
    %1495 = vmatpush2.msra.mxu0 0.0
    %1496 = vmatprep.subr.mxu0 0.0
    %1497 = vmatpush2.msra.mxu0 0.0
    %1498 = vmatprep.subr.mxu0 0.0
    %1499 = vmatpush2.msra.mxu0 0.0
    %1500 = vmatprep.subr.mxu0 0.0
    %1501 = vmatpush2.msra.mxu0 0.0
    %1502 = vmatprep.subr.mxu0 0.0
    %1503 = vmatpush2.msra.mxu0 0.0
    %1504 = vmatprep.subr.mxu0 0.0
    %1505 = vmatpush2.msra.mxu0 0.0
    %1506 = vmatprep.subr.mxu0 0.0
    %1507 = vmatpush2.msra.mxu0 0.0
    %1508 = vmatprep.subr.mxu0 0.0
    %1509 = vmatpush2.msra.mxu0 0.0
    %1510 = vmatprep.subr.mxu0 0.0
    %1511 = vmatpush2.msra.mxu0 0.0
    %1512 = vmatprep.subr.mxu0 0.0
    %1513 = vmatpush2.msra.mxu0 0.0
    %1514 = vmatprep.subr.mxu0 0.0
    %1515 = vmatpush2.msra.mxu0 0.0
    %1516 = vmatprep.subr.mxu0 0.0
    %1517 = vmatpush2.msra.mxu0 0.0
    %1518 = vmatprep.subr.mxu0 0.0
    %1519 = vmatpush2.msra.mxu0 0.0
    %1520 = vmatprep.subr.mxu0 0.0
    %1521 = vmatpush2.msra.mxu0 0.0
    %1522 = vmatprep.subr.mxu0 0.0
    %1523 = vmatpush2.msra.mxu0 0.0
    %1524 = vmatprep.mubr.f32.mxu0 0.0
    %1525 = vmatmul.mubr.f32.gmra.mxu0 %v1388
    %v1526 = vpop.f32.mrf.mxu0
    %v1527 = vadd.f32 0.0, %v1526
    %v1528 = vpop.f32.mrf.mxu0
    %v1529 = vadd.f32 0.0, %v1528
    %1530 = vdwg.mxu0
    %v1535 = vrot.slane %v1456, 6
    %v1536 = vrot.slane %v1458, 6
    %v1537 = vrot.slane %v1527, 6
    %v1538 = vrot.slane %v1529, 6
    %v1543 = vadd.f32 %v305, %v1535
    %v1544 = vadd.f32 %v307, %v1536
    %v1545 = vadd.f32 %v382, %v1537
    %v1546 = vadd.f32 %v384, %v1538
    %v1547 = vxor.u32 %v1543, 2147483648
    %v1548 = vmul.f32 %v1547, 1.442695
    %v1549 = vpow.pop %v1548
    %v1550 = vadd.f32 %v1549, 1.0
    %v1551 = vrcp.pop %v1550
    %v1552 = vmul.f32 1.0, %v1551
    %v1553 = vxor.u32 %v1544, 2147483648
    %v1554 = vmul.f32 %v1553, 1.442695
    %v1555 = vpow.pop %v1554
    %v1556 = vadd.f32 %v1555, 1.0
    %v1557 = vrcp.pop %v1556
    %v1558 = vmul.f32 1.0, %v1557
    %v1559 = vtanh.pop %v1545
    %v1560 = vxor.u32 %v1546, 2147483648
    %v1561 = vmul.f32 %v1560, 1.442695
    %v1562 = vpow.pop %v1561
    %v1563 = vadd.f32 %v1562, 1.0
    %v1564 = vrcp.pop %v1563
    %v1565 = vmul.f32 1.0, %v1564
    %v1567 = vrot.slane %v1386, 6
    %v1569 = vmul.f32 %v1558, %v1567
    %v1570 = vmul.f32 %v1552, %v1559
    %v1571 = vadd.f32 %v1569, %v1570
    %v1572 = vtanh.pop %v1571
    %v1573 = vmul.f32 %v1565, %v1572
    %v1575 = vrot.slane %v1573, 2
    %1577 = vmatprep.subr.mxu0 %v479
    %1578 = vmatpush1.msra.mxu0 %v478
    %1579 = vmatprep.subr.mxu0 %v475
    %1580 = vmatpush1.msra.mxu0 %v474
    %1581 = vmatprep.subr.mxu0 %v471
    %1582 = vmatpush1.msra.mxu0 %v470
    %1583 = vmatprep.subr.mxu0 %v467
    %1584 = vmatpush1.msra.mxu0 %v466
    %1585 = vmatprep.subr.mxu0 %v463
    %1586 = vmatpush1.msra.mxu0 %v462
    %1587 = vmatprep.subr.mxu0 %v459
    %1588 = vmatpush1.msra.mxu0 %v458
    %1589 = vmatprep.subr.mxu0 %v455
    %1590 = vmatpush1.msra.mxu0 %v454
    %1591 = vmatprep.subr.mxu0 %v451
    %1592 = vmatpush1.msra.mxu0 %v450
    %1593 = vmatprep.subr.mxu0 %v447
    %1594 = vmatpush1.msra.mxu0 %v446
    %1595 = vmatprep.subr.mxu0 %v443
    %1596 = vmatpush1.msra.mxu0 %v442
    %1597 = vmatprep.subr.mxu0 %v439
    %1598 = vmatpush1.msra.mxu0 %v438
    %1599 = vmatprep.subr.mxu0 %v435
    %1600 = vmatpush1.msra.mxu0 %v434
    %1601 = vmatprep.subr.mxu0 %v431
    %1602 = vmatpush1.msra.mxu0 %v430
    %1603 = vmatprep.subr.mxu0 %v427
    %1604 = vmatpush1.msra.mxu0 %v426
    %1605 = vmatprep.subr.mxu0 %v423
    %1606 = vmatpush1.msra.mxu0 %v422
    %1607 = vmatprep.subr.mxu0 %v419
    %1608 = vmatpush1.msra.mxu0 %v418
    %1609 = vmatprep.subr.mxu0 0.0
    %1610 = vmatpush2.msra.mxu0 0.0
    %1611 = vmatprep.subr.mxu0 0.0
    %1612 = vmatpush2.msra.mxu0 0.0
    %1613 = vmatprep.subr.mxu0 0.0
    %1614 = vmatpush2.msra.mxu0 0.0
    %1615 = vmatprep.subr.mxu0 0.0
    %1616 = vmatpush2.msra.mxu0 0.0
    %1617 = vmatprep.subr.mxu0 0.0
    %1618 = vmatpush2.msra.mxu0 0.0
    %1619 = vmatprep.subr.mxu0 0.0
    %1620 = vmatpush2.msra.mxu0 0.0
    %1621 = vmatprep.subr.mxu0 0.0
    %1622 = vmatpush2.msra.mxu0 0.0
    %1623 = vmatprep.subr.mxu0 0.0
    %1624 = vmatpush2.msra.mxu0 0.0
    %1625 = vmatprep.subr.mxu0 0.0
    %1626 = vmatpush2.msra.mxu0 0.0
    %1627 = vmatprep.subr.mxu0 0.0
    %1628 = vmatpush2.msra.mxu0 0.0
    %1629 = vmatprep.subr.mxu0 0.0
    %1630 = vmatpush2.msra.mxu0 0.0
    %1631 = vmatprep.subr.mxu0 0.0
    %1632 = vmatpush2.msra.mxu0 0.0
    %1633 = vmatprep.subr.mxu0 0.0
    %1634 = vmatpush2.msra.mxu0 0.0
    %1635 = vmatprep.subr.mxu0 0.0
    %1636 = vmatpush2.msra.mxu0 0.0
    %1637 = vmatprep.subr.mxu0 0.0
    %1638 = vmatpush2.msra.mxu0 0.0
    %1639 = vmatprep.subr.mxu0 0.0
    %1640 = vmatpush2.msra.mxu0 0.0
    %1641 = vmatprep.mubr.f32.mxu0 0.0
    %1642 = vmatmul.mubr.f32.gmra.mxu0 %v1575
    %v1643 = vpop.f32.mrf.mxu0
    %v1644 = vadd.f32 0.0, %v1643
    %v1645 = vpop.f32.mrf.mxu0
    %v1646 = vadd.f32 0.0, %v1645
    %1647 = vdwg.mxu0
    %1648 = vmatprep.subr.mxu0 %v481
    %1649 = vmatpush1.msra.mxu0 %v480
    %1650 = vmatprep.subr.mxu0 %v477
    %1651 = vmatpush1.msra.mxu0 %v476
    %1652 = vmatprep.subr.mxu0 %v473
    %1653 = vmatpush1.msra.mxu0 %v472
    %1654 = vmatprep.subr.mxu0 %v469
    %1655 = vmatpush1.msra.mxu0 %v468
    %1656 = vmatprep.subr.mxu0 %v465
    %1657 = vmatpush1.msra.mxu0 %v464
    %1658 = vmatprep.subr.mxu0 %v461
    %1659 = vmatpush1.msra.mxu0 %v460
    %1660 = vmatprep.subr.mxu0 %v457
    %1661 = vmatpush1.msra.mxu0 %v456
    %1662 = vmatprep.subr.mxu0 %v453
    %1663 = vmatpush1.msra.mxu0 %v452
    %1664 = vmatprep.subr.mxu0 %v449
    %1665 = vmatpush1.msra.mxu0 %v448
    %1666 = vmatprep.subr.mxu0 %v445
    %1667 = vmatpush1.msra.mxu0 %v444
    %1668 = vmatprep.subr.mxu0 %v441
    %1669 = vmatpush1.msra.mxu0 %v440
    %1670 = vmatprep.subr.mxu0 %v437
    %1671 = vmatpush1.msra.mxu0 %v436
    %1672 = vmatprep.subr.mxu0 %v433
    %1673 = vmatpush1.msra.mxu0 %v432
    %1674 = vmatprep.subr.mxu0 %v429
    %1675 = vmatpush1.msra.mxu0 %v428
    %1676 = vmatprep.subr.mxu0 %v425
    %1677 = vmatpush1.msra.mxu0 %v424
    %1678 = vmatprep.subr.mxu0 %v421
    %1679 = vmatpush1.msra.mxu0 %v420
    %1680 = vmatprep.subr.mxu0 0.0
    %1681 = vmatpush2.msra.mxu0 0.0
    %1682 = vmatprep.subr.mxu0 0.0
    %1683 = vmatpush2.msra.mxu0 0.0
    %1684 = vmatprep.subr.mxu0 0.0
    %1685 = vmatpush2.msra.mxu0 0.0
    %1686 = vmatprep.subr.mxu0 0.0
    %1687 = vmatpush2.msra.mxu0 0.0
    %1688 = vmatprep.subr.mxu0 0.0
    %1689 = vmatpush2.msra.mxu0 0.0
    %1690 = vmatprep.subr.mxu0 0.0
    %1691 = vmatpush2.msra.mxu0 0.0
    %1692 = vmatprep.subr.mxu0 0.0
    %1693 = vmatpush2.msra.mxu0 0.0
    %1694 = vmatprep.subr.mxu0 0.0
    %1695 = vmatpush2.msra.mxu0 0.0
    %1696 = vmatprep.subr.mxu0 0.0
    %1697 = vmatpush2.msra.mxu0 0.0
    %1698 = vmatprep.subr.mxu0 0.0
    %1699 = vmatpush2.msra.mxu0 0.0
    %1700 = vmatprep.subr.mxu0 0.0
    %1701 = vmatpush2.msra.mxu0 0.0
    %1702 = vmatprep.subr.mxu0 0.0
    %1703 = vmatpush2.msra.mxu0 0.0
    %1704 = vmatprep.subr.mxu0 0.0
    %1705 = vmatpush2.msra.mxu0 0.0
    %1706 = vmatprep.subr.mxu0 0.0
    %1707 = vmatpush2.msra.mxu0 0.0
    %1708 = vmatprep.subr.mxu0 0.0
    %1709 = vmatpush2.msra.mxu0 0.0
    %1710 = vmatprep.subr.mxu0 0.0
    %1711 = vmatpush2.msra.mxu0 0.0
    %1712 = vmatprep.mubr.f32.mxu0 0.0
    %1713 = vmatmul.mubr.f32.gmra.mxu0 %v1575
    %v1714 = vpop.f32.mrf.mxu0
    %v1715 = vadd.f32 0.0, %v1714
    %v1716 = vpop.f32.mrf.mxu0
    %v1717 = vadd.f32 0.0, %v1716
    %1718 = vdwg.mxu0
    %v1723 = vrot.slane %v1644, 4
    %v1724 = vrot.slane %v1646, 4
    %v1725 = vrot.slane %v1715, 4
    %v1726 = vrot.slane %v1717, 4
    %v1731 = vadd.f32 %v305, %v1723
    %v1732 = vadd.f32 %v307, %v1724
    %v1733 = vadd.f32 %v382, %v1725
    %v1734 = vadd.f32 %v384, %v1726
    %v1735 = vxor.u32 %v1731, 2147483648
    %v1736 = vmul.f32 %v1735, 1.442695
    %v1737 = vpow.pop %v1736
    %v1738 = vadd.f32 %v1737, 1.0
    %v1739 = vrcp.pop %v1738
    %v1740 = vmul.f32 1.0, %v1739
    %v1741 = vxor.u32 %v1732, 2147483648
    %v1742 = vmul.f32 %v1741, 1.442695
    %v1743 = vpow.pop %v1742
    %v1744 = vadd.f32 %v1743, 1.0
    %v1745 = vrcp.pop %v1744
    %v1746 = vmul.f32 1.0, %v1745
    %v1747 = vtanh.pop %v1733
    %v1748 = vxor.u32 %v1734, 2147483648
    %v1749 = vmul.f32 %v1748, 1.442695
    %v1750 = vpow.pop %v1749
    %v1751 = vadd.f32 %v1750, 1.0
    %v1752 = vrcp.pop %v1751
    %v1753 = vmul.f32 1.0, %v1752
    %v1755 = vrot.slane %v1571, 6
    %v1757 = vmul.f32 %v1746, %v1755
    %v1758 = vmul.f32 %v1740, %v1747
    %v1759 = vadd.f32 %v1757, %v1758
    %v1760 = vtanh.pop %v1759
    %v1761 = vmul.f32 %v1753, %v1760
    %v1763 = vrot.slane %v1761, 4
    %1765 = vmatprep.subr.mxu0 %v479
    %1766 = vmatpush1.msra.mxu0 %v478
    %1767 = vmatprep.subr.mxu0 %v475
    %1768 = vmatpush1.msra.mxu0 %v474
    %1769 = vmatprep.subr.mxu0 %v471
    %1770 = vmatpush1.msra.mxu0 %v470
    %1771 = vmatprep.subr.mxu0 %v467
    %1772 = vmatpush1.msra.mxu0 %v466
    %1773 = vmatprep.subr.mxu0 %v463
    %1774 = vmatpush1.msra.mxu0 %v462
    %1775 = vmatprep.subr.mxu0 %v459
    %1776 = vmatpush1.msra.mxu0 %v458
    %1777 = vmatprep.subr.mxu0 %v455
    %1778 = vmatpush1.msra.mxu0 %v454
    %1779 = vmatprep.subr.mxu0 %v451
    %1780 = vmatpush1.msra.mxu0 %v450
    %1781 = vmatprep.subr.mxu0 %v447
    %1782 = vmatpush1.msra.mxu0 %v446
    %1783 = vmatprep.subr.mxu0 %v443
    %1784 = vmatpush1.msra.mxu0 %v442
    %1785 = vmatprep.subr.mxu0 %v439
    %1786 = vmatpush1.msra.mxu0 %v438
    %1787 = vmatprep.subr.mxu0 %v435
    %1788 = vmatpush1.msra.mxu0 %v434
    %1789 = vmatprep.subr.mxu0 %v431
    %1790 = vmatpush1.msra.mxu0 %v430
    %1791 = vmatprep.subr.mxu0 %v427
    %1792 = vmatpush1.msra.mxu0 %v426
    %1793 = vmatprep.subr.mxu0 %v423
    %1794 = vmatpush1.msra.mxu0 %v422
    %1795 = vmatprep.subr.mxu0 %v419
    %1796 = vmatpush1.msra.mxu0 %v418
    %1797 = vmatprep.subr.mxu0 0.0
    %1798 = vmatpush2.msra.mxu0 0.0
    %1799 = vmatprep.subr.mxu0 0.0
    %1800 = vmatpush2.msra.mxu0 0.0
    %1801 = vmatprep.subr.mxu0 0.0
    %1802 = vmatpush2.msra.mxu0 0.0
    %1803 = vmatprep.subr.mxu0 0.0
    %1804 = vmatpush2.msra.mxu0 0.0
    %1805 = vmatprep.subr.mxu0 0.0
    %1806 = vmatpush2.msra.mxu0 0.0
    %1807 = vmatprep.subr.mxu0 0.0
    %1808 = vmatpush2.msra.mxu0 0.0
    %1809 = vmatprep.subr.mxu0 0.0
    %1810 = vmatpush2.msra.mxu0 0.0
    %1811 = vmatprep.subr.mxu0 0.0
    %1812 = vmatpush2.msra.mxu0 0.0
    %1813 = vmatprep.subr.mxu0 0.0
    %1814 = vmatpush2.msra.mxu0 0.0
    %1815 = vmatprep.subr.mxu0 0.0
    %1816 = vmatpush2.msra.mxu0 0.0
    %1817 = vmatprep.subr.mxu0 0.0
    %1818 = vmatpush2.msra.mxu0 0.0
    %1819 = vmatprep.subr.mxu0 0.0
    %1820 = vmatpush2.msra.mxu0 0.0
    %1821 = vmatprep.subr.mxu0 0.0
    %1822 = vmatpush2.msra.mxu0 0.0
    %1823 = vmatprep.subr.mxu0 0.0
    %1824 = vmatpush2.msra.mxu0 0.0
    %1825 = vmatprep.subr.mxu0 0.0
    %1826 = vmatpush2.msra.mxu0 0.0
    %1827 = vmatprep.subr.mxu0 0.0
    %1828 = vmatpush2.msra.mxu0 0.0
    %1829 = vmatprep.mubr.f32.mxu0 0.0
    %1830 = vmatmul.mubr.f32.gmra.mxu0 %v1763
    %v1831 = vpop.f32.mrf.mxu0
    %v1832 = vadd.f32 0.0, %v1831
    %v1833 = vpop.f32.mrf.mxu0
    %v1834 = vadd.f32 0.0, %v1833
    %1835 = vdwg.mxu0
    %1836 = vmatprep.subr.mxu0 %v481
    %1837 = vmatpush1.msra.mxu0 %v480
    %1838 = vmatprep.subr.mxu0 %v477
    %1839 = vmatpush1.msra.mxu0 %v476
    %1840 = vmatprep.subr.mxu0 %v473
    %1841 = vmatpush1.msra.mxu0 %v472
    %1842 = vmatprep.subr.mxu0 %v469
    %1843 = vmatpush1.msra.mxu0 %v468
    %1844 = vmatprep.subr.mxu0 %v465
    %1845 = vmatpush1.msra.mxu0 %v464
    %1846 = vmatprep.subr.mxu0 %v461
    %1847 = vmatpush1.msra.mxu0 %v460
    %1848 = vmatprep.subr.mxu0 %v457
    %1849 = vmatpush1.msra.mxu0 %v456
    %1850 = vmatprep.subr.mxu0 %v453
    %1851 = vmatpush1.msra.mxu0 %v452
    %1852 = vmatprep.subr.mxu0 %v449
    %1853 = vmatpush1.msra.mxu0 %v448
    %1854 = vmatprep.subr.mxu0 %v445
    %1855 = vmatpush1.msra.mxu0 %v444
    %1856 = vmatprep.subr.mxu0 %v441
    %1857 = vmatpush1.msra.mxu0 %v440
    %1858 = vmatprep.subr.mxu0 %v437
    %1859 = vmatpush1.msra.mxu0 %v436
    %1860 = vmatprep.subr.mxu0 %v433
    %1861 = vmatpush1.msra.mxu0 %v432
    %1862 = vmatprep.subr.mxu0 %v429
    %1863 = vmatpush1.msra.mxu0 %v428
    %1864 = vmatprep.subr.mxu0 %v425
    %1865 = vmatpush1.msra.mxu0 %v424
    %1866 = vmatprep.subr.mxu0 %v421
    %1867 = vmatpush1.msra.mxu0 %v420
    %1868 = vmatprep.subr.mxu0 0.0
    %1869 = vmatpush2.msra.mxu0 0.0
    %1870 = vmatprep.subr.mxu0 0.0
    %1871 = vmatpush2.msra.mxu0 0.0
    %1872 = vmatprep.subr.mxu0 0.0
    %1873 = vmatpush2.msra.mxu0 0.0
    %1874 = vmatprep.subr.mxu0 0.0
    %1875 = vmatpush2.msra.mxu0 0.0
    %1876 = vmatprep.subr.mxu0 0.0
    %1877 = vmatpush2.msra.mxu0 0.0
    %1878 = vmatprep.subr.mxu0 0.0
    %1879 = vmatpush2.msra.mxu0 0.0
    %1880 = vmatprep.subr.mxu0 0.0
    %1881 = vmatpush2.msra.mxu0 0.0
    %1882 = vmatprep.subr.mxu0 0.0
    %1883 = vmatpush2.msra.mxu0 0.0
    %1884 = vmatprep.subr.mxu0 0.0
    %1885 = vmatpush2.msra.mxu0 0.0
    %1886 = vmatprep.subr.mxu0 0.0
    %1887 = vmatpush2.msra.mxu0 0.0
    %1888 = vmatprep.subr.mxu0 0.0
    %1889 = vmatpush2.msra.mxu0 0.0
    %1890 = vmatprep.subr.mxu0 0.0
    %1891 = vmatpush2.msra.mxu0 0.0
    %1892 = vmatprep.subr.mxu0 0.0
    %1893 = vmatpush2.msra.mxu0 0.0
    %1894 = vmatprep.subr.mxu0 0.0
    %1895 = vmatpush2.msra.mxu0 0.0
    %1896 = vmatprep.subr.mxu0 0.0
    %1897 = vmatpush2.msra.mxu0 0.0
    %1898 = vmatprep.subr.mxu0 0.0
    %1899 = vmatpush2.msra.mxu0 0.0
    %1900 = vmatprep.mubr.f32.mxu0 0.0
    %1901 = vmatmul.mubr.f32.gmra.mxu0 %v1763
    %v1902 = vpop.f32.mrf.mxu0
    %v1903 = vadd.f32 0.0, %v1902
    %v1904 = vpop.f32.mrf.mxu0
    %v1905 = vadd.f32 0.0, %v1904
    %1906 = vdwg.mxu0
    %v1911 = vrot.slane %v1832, 2
    %v1912 = vrot.slane %v1834, 2
    %v1913 = vrot.slane %v1903, 2
    %v1914 = vrot.slane %v1905, 2
    %v1919 = vadd.f32 %v305, %v1911
    %v1920 = vadd.f32 %v307, %v1912
    %v1921 = vadd.f32 %v382, %v1913
    %v1922 = vadd.f32 %v384, %v1914
    %v1923 = vxor.u32 %v1919, 2147483648
    %v1924 = vmul.f32 %v1923, 1.442695
    %v1925 = vpow.pop %v1924
    %v1926 = vadd.f32 %v1925, 1.0
    %v1927 = vrcp.pop %v1926
    %v1928 = vmul.f32 1.0, %v1927
    %v1929 = vxor.u32 %v1920, 2147483648
    %v1930 = vmul.f32 %v1929, 1.442695
    %v1931 = vpow.pop %v1930
    %v1932 = vadd.f32 %v1931, 1.0
    %v1933 = vrcp.pop %v1932
    %v1934 = vmul.f32 1.0, %v1933
    %v1935 = vtanh.pop %v1921
    %v1936 = vxor.u32 %v1922, 2147483648
    %v1937 = vmul.f32 %v1936, 1.442695
    %v1938 = vpow.pop %v1937
    %v1939 = vadd.f32 %v1938, 1.0
    %v1940 = vrcp.pop %v1939
    %v1941 = vmul.f32 1.0, %v1940
    %v1943 = vrot.slane %v1759, 6
    %v1945 = vmul.f32 %v1934, %v1943
    %v1946 = vmul.f32 %v1928, %v1935
    %v1947 = vadd.f32 %v1945, %v1946
    %v1948 = vtanh.pop %v1947
    %v1949 = vmul.f32 %v1941, %v1948
    %v1951 = vrot.slane %v1949, 6
    %v1953 = vmul.f32 %v651, %v1951
    %vm1954 = vcmask 1041408
    %v1955 = vsel %vm1954, %v1953, 0.0
    %1956 = vadd.xlane.f32.xlu0 %v1955
    %v1957 = vpop.xlane.xlu0 %1956
    %v1958 = vrot.slane %v1949, 4
    %v1960 = vmul.f32 %v836, %v1958
    %vm1961 = vcmask 1043458
    %v1962 = vsel %vm1961, %v1960, 0.0
    %1963 = vadd.xlane.f32.xlu0 %v1962
    %v1964 = vpop.xlane.xlu0 %1963
    %v1965 = vrot.slane %v1949, 2
    %v1967 = vmul.f32 %v1024, %v1965
    %vm1968 = vcmask 1045508
    %v1969 = vsel %vm1968, %v1967, 0.0
    %1970 = vadd.xlane.f32.xlu0 %v1969
    %v1971 = vpop.xlane.xlu0 %1970
    %v1972 = vmul.f32 %v1212, %v1949
    %vm1973 = vcmask 1047558
    %v1974 = vsel %vm1973, %v1972, 0.0
    %1975 = vadd.xlane.f32.xlu0 %v1974
    %v1976 = vpop.xlane.xlu0 %1975
    %v1977 = vmul.f32 %v1388, %v1951
    %v1978 = vsel %vm1954, %v1977, 0.0
    %1979 = vadd.xlane.f32.xlu0 %v1978
    %v1980 = vpop.xlane.xlu0 %1979
    %v1981 = vmul.f32 %v1573, %v1958
    %v1982 = vsel %vm1961, %v1981, 0.0
    %1983 = vadd.xlane.f32.xlu0 %v1982
    %v1984 = vpop.xlane.xlu0 %1983
    %v1985 = vmul.f32 %v1761, %v1965
    %v1986 = vsel %vm1968, %v1985, 0.0
    %1987 = vadd.xlane.f32.xlu0 %v1986
    %v1988 = vpop.xlane.xlu0 %1987
    %v1989 = vmul.f32 %v1949, %v1949
    %v1990 = vsel %vm1973, %v1989, 0.0
    %1991 = vadd.xlane.f32.xlu0 %v1990
    %v1992 = vpop.xlane.xlu0 %1991
    %v1994 = vrot.slane %v1964, 2
    %v1996 = vmax.f32 %v1957, %v1994
    %v1998 = vrot.slane %v1971, 4
    %v2000 = vmax.f32 %v1996, %v1998
    %v2002 = vrot.slane %v1976, 6
    %v2004 = vmax.f32 %v2000, %v2002
    %v2005 = vmax.f32 %v2004, %v1980
    %v2007 = vrot.slane %v1984, 2
    %v2009 = vmax.f32 %v2005, %v2007
    %v2011 = vrot.slane %v1988, 4
    %v2013 = vmax.f32 %v2009, %v2011
    %v2015 = vrot.slane %v1992, 6
    %v2017 = vmax.f32 %v2013, %v2015
    %v2018 = vsub.f32 %v1957, %v2017
    %v2019 = vmul.f32 %v2018, 1.442695
    %v2020 = vpow.pop %v2019
    %v2022 = vrot.slane %v2017, 6
    %v2024 = vsub.f32 %v1964, %v2022
    %v2025 = vmul.f32 %v2024, 1.442695
    %v2026 = vpow.pop %v2025
    %v2027 = vrot.slane %v2017, 4
    %v2029 = vsub.f32 %v1971, %v2027
    %v2030 = vmul.f32 %v2029, 1.442695
    %v2031 = vpow.pop %v2030
    %v2032 = vrot.slane %v2017, 2
    %v2034 = vsub.f32 %v1976, %v2032
    %v2035 = vmul.f32 %v2034, 1.442695
    %v2036 = vpow.pop %v2035
    %v2037 = vsub.f32 %v1980, %v2017
    %v2038 = vmul.f32 %v2037, 1.442695
    %v2039 = vpow.pop %v2038
    %v2040 = vsub.f32 %v1984, %v2022
    %v2041 = vmul.f32 %v2040, 1.442695
    %v2042 = vpow.pop %v2041
    %v2043 = vsub.f32 %v1988, %v2027
    %v2044 = vmul.f32 %v2043, 1.442695
    %v2045 = vpow.pop %v2044
    %v2046 = vsub.f32 %v1992, %v2032
    %v2047 = vmul.f32 %v2046, 1.442695
    %v2048 = vpow.pop %v2047
    %v2050 = vrot.slane %v2026, 2
    %v2052 = vadd.f32 %v2020, %v2050
    %v2054 = vrot.slane %v2031, 4
    %v2056 = vadd.f32 %v2052, %v2054
    %v2058 = vrot.slane %v2036, 6
    %v2060 = vadd.f32 %v2056, %v2058
    %v2061 = vadd.f32 %v2060, %v2039
    %v2063 = vrot.slane %v2042, 2
    %v2065 = vadd.f32 %v2061, %v2063
    %v2067 = vrot.slane %v2045, 4
    %v2069 = vadd.f32 %v2065, %v2067
    %v2071 = vrot.slane %v2048, 6
    %v2073 = vadd.f32 %v2069, %v2071
    %v2074 = vrcp.pop %v2073
    %v2075 = vmul.f32 %v2020, %v2074
    %2077 = vset.pattern.permute.xlu0 0
    %2078 = vperm.xlu0 %2077, %v2075
    %v2079 = vpop.permute.xlu0 %2078
    %v2081 = vmul.f32 %v651, %v2079
    %v2083 = vrot.slane %v2074, 6
    %v2085 = vmul.f32 %v2026, %v2083
    %2087 = vset.pattern.permute.xlu0 0
    %2088 = vperm.xlu0 %2087, %v2085
    %v2089 = vpop.permute.xlu0 %2088
    %v2091 = vmul.f32 %v836, %v2089
    %v2093 = vrot.slane %v2091, 2
    %v2095 = vadd.f32 %v2081, %v2093
    %v2096 = vrot.slane %v2074, 4
    %v2098 = vmul.f32 %v2031, %v2096
    %2100 = vset.pattern.permute.xlu0 0
    %2101 = vperm.xlu0 %2100, %v2098
    %v2102 = vpop.permute.xlu0 %2101
    %v2104 = vmul.f32 %v1024, %v2102
    %v2106 = vrot.slane %v2104, 4
    %v2108 = vadd.f32 %v2095, %v2106
    %v2109 = vrot.slane %v2074, 2
    %v2111 = vmul.f32 %v2036, %v2109
    %2113 = vset.pattern.permute.xlu0 0
    %2114 = vperm.xlu0 %2113, %v2111
    %v2115 = vpop.permute.xlu0 %2114
    %v2117 = vmul.f32 %v1212, %v2115
    %v2119 = vrot.slane %v2117, 6
    %v2121 = vadd.f32 %v2108, %v2119
    %v2122 = vmul.f32 %v2039, %v2074
    %2124 = vset.pattern.permute.xlu0 0
    %2125 = vperm.xlu0 %2124, %v2122
    %v2126 = vpop.permute.xlu0 %2125
    %v2128 = vmul.f32 %v1388, %v2126
    %v2129 = vadd.f32 %v2121, %v2128
    %v2130 = vmul.f32 %v2042, %v2083
    %2132 = vset.pattern.permute.xlu0 0
    %2133 = vperm.xlu0 %2132, %v2130
    %v2134 = vpop.permute.xlu0 %2133
    %v2136 = vmul.f32 %v1573, %v2134
    %v2138 = vrot.slane %v2136, 2
    %v2140 = vadd.f32 %v2129, %v2138
    %v2141 = vmul.f32 %v2045, %v2096
    %2143 = vset.pattern.permute.xlu0 0
    %2144 = vperm.xlu0 %2143, %v2141
    %v2145 = vpop.permute.xlu0 %2144
    %v2147 = vmul.f32 %v1761, %v2145
    %v2149 = vrot.slane %v2147, 4
    %v2151 = vadd.f32 %v2140, %v2149
    %v2152 = vmul.f32 %v2048, %v2109
    %2154 = vset.pattern.permute.xlu0 0
    %2155 = vperm.xlu0 %2154, %v2152
    %v2156 = vpop.permute.xlu0 %2155
    %v2158 = vmul.f32 %v1949, %v2156
    %v2160 = vrot.slane %v2158, 6
    %v2162 = vadd.f32 %v2151, %v2160
    %v2163 = vmax.f32 %v2162, 0.0
    %v2164 = vld [vmem:[%s6] sm:$0xf]
    %v2165 = vld [vmem:[%s6 + $0x4] sm:$0xf]
    %v2166 = vld [vmem:[%s6 + $0x8] sm:$0xf]
    %v2167 = vld [vmem:[%s6 + $0xc] sm:$0xf]
    %v2168 = vld [vmem:[%s6 + $0x10] sm:$0xf]
    %v2169 = vld [vmem:[%s6 + $0x14] sm:$0xf]
    %v2170 = vld [vmem:[%s6 + $0x18] sm:$0xf]
    %v2171 = vld [vmem:[%s6 + $0x1c] sm:$0xf]
    %v2172 = vld [vmem:[%s6 + $0x20] sm:$0xf]
    %v2173 = vld [vmem:[%s6 + $0x24] sm:$0xf]
    %v2174 = vld [vmem:[%s6 + $0x28] sm:$0xf]
    %v2175 = vld [vmem:[%s6 + $0x2c] sm:$0xf]
    %v2176 = vld [vmem:[%s6 + $0x30] sm:$0xf]
    %v2177 = vld [vmem:[%s6 + $0x34] sm:$0xf]
    %v2178 = vld [vmem:[%s6 + $0x38] sm:$0xf]
    %v2179 = vld [vmem:[%s6 + $0x3c] sm:$0xf]
    %v2180 = vunpack.c.l.bf16 %v2164
    %v2181 = vunpack.c.l.bf16 %v2165
    %v2182 = vunpack.c.l.bf16 %v2166
    %v2183 = vunpack.c.l.bf16 %v2167
    %v2184 = vunpack.c.l.bf16 %v2168
    %v2185 = vunpack.c.l.bf16 %v2169
    %v2186 = vunpack.c.l.bf16 %v2170
    %v2187 = vunpack.c.l.bf16 %v2171
    %v2188 = vunpack.c.l.bf16 %v2172
    %v2189 = vunpack.c.l.bf16 %v2173
    %v2190 = vunpack.c.l.bf16 %v2174
    %v2191 = vunpack.c.l.bf16 %v2175
    %v2192 = vunpack.c.l.bf16 %v2176
    %v2193 = vunpack.c.l.bf16 %v2177
    %v2194 = vunpack.c.l.bf16 %v2178
    %v2195 = vunpack.c.l.bf16 %v2179
    %v2196 = vld [vmem:[%s7] sm:$0x1]
    %v2198 = vlaneseq
    %v2199 = vshrl.u32 %v2198, 7
    %v2200 = vsub.s32 0, %v2199
    %v2201 = vrot.slane %v2196, %v2200
    %2203 = vmatprep.subr.mxu0 0.0
    %2204 = vmatpush1.msra.mxu0 %v2195
    %2205 = vmatprep.subr.mxu0 0.0
    %2206 = vmatpush1.msra.mxu0 %v2194
    %2207 = vmatprep.subr.mxu0 0.0
    %2208 = vmatpush1.msra.mxu0 %v2193
    %2209 = vmatprep.subr.mxu0 0.0
    %2210 = vmatpush1.msra.mxu0 %v2192
    %2211 = vmatprep.subr.mxu0 0.0
    %2212 = vmatpush1.msra.mxu0 %v2191
    %2213 = vmatprep.subr.mxu0 0.0
    %2214 = vmatpush1.msra.mxu0 %v2190
    %2215 = vmatprep.subr.mxu0 0.0
    %2216 = vmatpush1.msra.mxu0 %v2189
    %2217 = vmatprep.subr.mxu0 0.0
    %2218 = vmatpush1.msra.mxu0 %v2188
    %2219 = vmatprep.subr.mxu0 0.0
    %2220 = vmatpush1.msra.mxu0 %v2187
    %2221 = vmatprep.subr.mxu0 0.0
    %2222 = vmatpush1.msra.mxu0 %v2186
    %2223 = vmatprep.subr.mxu0 0.0
    %2224 = vmatpush1.msra.mxu0 %v2185
    %2225 = vmatprep.subr.mxu0 0.0
    %2226 = vmatpush1.msra.mxu0 %v2184
    %2227 = vmatprep.subr.mxu0 0.0
    %2228 = vmatpush1.msra.mxu0 %v2183
    %2229 = vmatprep.subr.mxu0 0.0
    %2230 = vmatpush1.msra.mxu0 %v2182
    %2231 = vmatprep.subr.mxu0 0.0
    %2232 = vmatpush1.msra.mxu0 %v2181
    %2233 = vmatprep.subr.mxu0 0.0
    %2234 = vmatpush1.msra.mxu0 %v2180
    %2235 = vmatprep.subr.mxu0 0.0
    %2236 = vmatpush2.msra.mxu0 0.0
    %2237 = vmatprep.subr.mxu0 0.0
    %2238 = vmatpush2.msra.mxu0 0.0
    %2239 = vmatprep.subr.mxu0 0.0
    %2240 = vmatpush2.msra.mxu0 0.0
    %2241 = vmatprep.subr.mxu0 0.0
    %2242 = vmatpush2.msra.mxu0 0.0
    %2243 = vmatprep.subr.mxu0 0.0
    %2244 = vmatpush2.msra.mxu0 0.0
    %2245 = vmatprep.subr.mxu0 0.0
    %2246 = vmatpush2.msra.mxu0 0.0
    %2247 = vmatprep.subr.mxu0 0.0
    %2248 = vmatpush2.msra.mxu0 0.0
    %2249 = vmatprep.subr.mxu0 0.0
    %2250 = vmatpush2.msra.mxu0 0.0
    %2251 = vmatprep.subr.mxu0 0.0
    %2252 = vmatpush2.msra.mxu0 0.0
    %2253 = vmatprep.subr.mxu0 0.0
    %2254 = vmatpush2.msra.mxu0 0.0
    %2255 = vmatprep.subr.mxu0 0.0
    %2256 = vmatpush2.msra.mxu0 0.0
    %2257 = vmatprep.subr.mxu0 0.0
    %2258 = vmatpush2.msra.mxu0 0.0
    %2259 = vmatprep.subr.mxu0 0.0
    %2260 = vmatpush2.msra.mxu0 0.0
    %2261 = vmatprep.subr.mxu0 0.0
    %2262 = vmatpush2.msra.mxu0 0.0
    %2263 = vmatprep.subr.mxu0 0.0
    %2264 = vmatpush2.msra.mxu0 0.0
    %2265 = vmatprep.subr.mxu0 0.0
    %2266 = vmatpush2.msra.mxu0 0.0
    %2267 = vmatprep.mubr.f32.mxu0 0.0
    %2268 = vmatmul.mubr.f32.gmra.mxu0 %v2163
    %v2269 = vpop.f32.mrf.mxu0
    %v2270 = vadd.f32 %v2201, %v2269
    %v2271 = vpop.f32.mrf.mxu0
    %2272 = vdwg.mxu0
    %2273 = vst [vmem:[#allocation7] sm:$0x3] %v2270
    // Predicated region
    $region42: #{critic_forward.1} parent=1 // pred_check
      _
    $region43: #{critic_forward.1} parent=1 // pred_check_branch
      %2275 = sbr.rel (0) target = $region45
    $region44: #{critic_forward.1} parent=1 // pred_region
      %s2277 = ssub.s32 32, 32
      %2278 = vsyncadd [#allocation4], %s2277
      %s2280 = sshll.u32 [#allocation7], 4
      %s2281 = int_to_ptr.vmem [resolvable:$true] %s2280
      %2283 = dma.vmem_to_hbm [thread:$0]  %s2281, 32, %s8, [#allocation4]
    $region45: #{critic_forward.1} parent=1 // pred_fallthru
      _
    // Predicated region
    $region46: #{critic_forward.1} parent=1 // pred_check
      _
    $region47: #{critic_forward.1} parent=1 // pred_check_branch
      %2285 = sbr.rel (0) target = $region49
    $region48: #{critic_forward.1} parent=1 // pred_region
      %2286 = dma.done [#allocation4], 32
    $region49: #{critic_forward.1} parent=1 // pred_fallthru
      _
    %2287 = vsyncpa [#allocation3], 1
    %2288 = vsyncpa [#allocation6], 1
    %2289 = vsyncpa [#allocation4], 1

</llo_original>
